<compile_context>
chip_gen: v5e
topology: v5e:2x2
jax: 0.10.0
libtpu: 0.0.40
codegen_flags: <defaults>
</compile_context>

<pallas_src>
import math

import jax
import jax.numpy as jnp
from jax.experimental import pallas as pl
from jax.experimental.pallas import tpu as pltpu

_NUM_CLASSES = 10
_OUT_LANES = 128          # lane-dense output slab; real logits live in lanes [0, 10)


def _mlp_kernel(x_ref,
                w0_ref, b0_ref,
                w1_ref, b1_ref,
                w2_ref, b2_ref,
                w3_ref, b3_ref,
                w4_ref, b4_ref,
                w5_ref, b5_ref,
                out_ref):
    """Fused MLP forward for one (batch_tile, image_size) tile, all in VMEM.

    Weights are (in, out) so the kernel computes h @ W + b (== PyTorch x @ W.T + b).
    The last layer is pre-padded to _OUT_LANES output columns so the final matmul
    is lane-dense and the output store is a full, unmasked 128-lane store.
    """

    def dense(h, w_ref, b_ref):
        # Cast activations to the weight dtype so a bf16 weight path hits the
        # bf16 MXU; accumulation is always f32.
        z = jnp.dot(h.astype(w_ref.dtype), w_ref[...],
                    preferred_element_type=jnp.float32)
        return z + b_ref[...]                 # bias (1, out) f32 -> broadcasts

    def sigmoid(z):
        # sigmoid(z) == 0.5 * tanh(0.5 * z) + 0.5 ; tanh goes to the EUP slot,
        # keeping the serial layer chain off the VALU divide.
        return 0.5 * jnp.tanh(0.5 * z) + 0.5

    h = x_ref[...]
    h = sigmoid(dense(h, w0_ref, b0_ref))     # (TB, 128)
    h = sigmoid(dense(h, w1_ref, b1_ref))     # (TB, 64)
    h = sigmoid(dense(h, w2_ref, b2_ref))     # (TB, 10)
    h = sigmoid(dense(h, w3_ref, b3_ref))     # (TB, 10)
    h = sigmoid(dense(h, w4_ref, b4_ref))     # (TB, 10)
    z = dense(h, w5_ref, b5_ref)              # (TB, 128); lanes >= 10 are exactly 0

    # Numerically-stable log_softmax over the first _NUM_CLASSES lanes only.
    lane = jax.lax.broadcasted_iota(jnp.int32, z.shape, 1)
    valid = lane < _NUM_CLASSES
    zm = jnp.where(valid, z, -1e30)
    m = jnp.max(zm, axis=-1, keepdims=True)
    s = zm - m
    e = jnp.where(valid, jnp.exp(s), 0.0)
    lse = jnp.log(jnp.sum(e, axis=-1, keepdims=True))
    # Lanes >= 10 hold junk (huge negative values); the wrapper slices them off.
    out_ref[...] = (s - lse).astype(out_ref.dtype)


def model_f_forward(x, params, *, image_size, batch_tile=256,
                    compute_dtype=jnp.float32):
    """x: any shape flattening to (-1, image_size), like the PyTorch x.view()."""
    assert batch_tile % 8 == 0, "batch_tile must be a multiple of 8 (sublanes)"

    x2d = x.reshape(-1, image_size).astype(compute_dtype)
    B = x2d.shape[0]
    n_tiles = int(pl.cdiv(B, batch_tile))
    Bp = n_tiles * batch_tile
    if Bp != B:
        x2d = jnp.pad(x2d, ((0, Bp - B), (0, 0)))        # zero rows, sliced off below

    (w0, b0), (w1, b1), (w2, b2), (w3, b3), (w4, b4), (w5, b5) = params

    # Weights in compute_dtype (bf16 path halves HBM traffic + uses bf16 MXU);
    # biases stay f32 (added after the f32 accumulation).
    w0, w1, w2, w3, w4, w5 = (w.astype(compute_dtype) for w in (w0, w1, w2, w3, w4, w5))
    b0, b1, b2, b3, b4, b5 = (b.astype(jnp.float32) for b in (b0, b1, b2, b3, b4, b5))

    # Lane-dense final layer: pad out-features 10 -> 128 with zero columns.
    w5 = jnp.pad(w5, ((0, 0), (0, _OUT_LANES - _NUM_CLASSES)))
    b5 = jnp.pad(b5, ((0, 0), (0, _OUT_LANES - _NUM_CLASSES)))

    flat_params = (w0, b0, w1, b1, w2, b2, w3, b3, w4, b4, w5, b5)

    def full_spec(arr):
        # Whole parameter resident in VMEM; constant index_map so the same
        # block is reused every grid step (no re-DMA after step 0).
        return pl.BlockSpec(arr.shape, lambda i, _nd=arr.ndim: (0,) * _nd)

    in_specs = [pl.BlockSpec((batch_tile, image_size), lambda i: (i, 0))]
    in_specs += [full_spec(p) for p in flat_params]
    out_spec = pl.BlockSpec((batch_tile, _OUT_LANES), lambda i: (i, 0))

    # Cost hint for XLA's scheduler.
    in_itemsize = jnp.dtype(compute_dtype).itemsize
    param_bytes = sum(int(p.size) * p.dtype.itemsize for p in flat_params)
    flops = 2 * Bp * (image_size * 128 + 128 * 64 + 64 * 10
                      + 2 * 10 * 10 + 10 * _OUT_LANES)
    transcendentals = Bp * (128 + 64 + 10 + 10 + 10 + _OUT_LANES)
    bytes_accessed = Bp * image_size * in_itemsize + Bp * _OUT_LANES * 4 + param_bytes
    cost = pl.CostEstimate(flops=int(flops),
                           transcendentals=int(transcendentals),
                           bytes_accessed=int(bytes_accessed))

    # VMEM budget: double-buffered x/out tiles + resident params + activation headroom.
    est = (2 * batch_tile * image_size * in_itemsize
           + 2 * batch_tile * _OUT_LANES * 4
           + 2 * param_bytes
           + 8 * batch_tile * (128 + 64 + 3 * 10 + 2 * _OUT_LANES))
    vmem_limit = int(min(max(2 * est, 32 * 1024 * 1024), 56 * 1024 * 1024))

    grid_spec = pltpu.PrefetchScalarGridSpec(
        num_scalar_prefetch=0,
        grid=(n_tiles,),
        in_specs=in_specs,
        out_specs=out_spec,
    )

    out = pl.pallas_call(
        _mlp_kernel,
        out_shape=jax.ShapeDtypeStruct((Bp, _OUT_LANES), jnp.float32),
        grid_spec=grid_spec,
        compiler_params=pltpu.CompilerParams(
            dimension_semantics=("parallel",),     # batch tiles shard across TCs (v7x)
            vmem_limit_bytes=vmem_limit),
        cost_estimate=cost,
    )(x2d, *flat_params)

    return out[:B, :_NUM_CLASSES]


def init_params(key, image_size):
    """nn.Linear-style init (uniform +-1/sqrt(fan_in)).
    Weights stored (in_features, out_features); biases (1, out_features)."""
    dims = [(image_size, 128), (128, 64), (64, 10), (10, 10), (10, 10), (10, 10)]
    params = []
    for fan_in, fan_out in dims:
        key, kw, kb = jax.random.split(key, 3)
        bound = 1.0 / math.sqrt(fan_in)
        w = jax.random.uniform(kw, (fan_in, fan_out), jnp.float32, -bound, bound)
        b = jax.random.uniform(kb, (1, fan_out), jnp.float32, -bound, bound)
        params.append((w, b))
    return params


def reference_forward(x, params, image_size):
    """Pure-JAX reference (matches the PyTorch forward)."""
    h = x.reshape(-1, image_size).astype(jnp.float32)
    for i, (w, b) in enumerate(params):
        h = h @ w + b
        if i < len(params) - 1:
            h = jax.nn.sigmoid(h)
    return jax.nn.log_softmax(h, axis=1)


if __name__ == "__main__":
    IMAGE_SIZE = 64
    key = jax.random.PRNGKey(0)
    kx, kx2, kp = jax.random.split(key, 3)
    params = init_params(kp, IMAGE_SIZE)

    # f32 path: (256, 1, 8, 8) flattens to (256, 64); two 128-row tiles so the
    # grid stays >= 2 (keeps both v7x TensorCores busy).
    x = jax.random.normal(kx, (256, 1, 8, 8), dtype=jnp.float32)
    out = jax.block_until_ready(
        model_f_forward(x, params, image_size=IMAGE_SIZE, batch_tile=128))
    ref = reference_forward(x, params, IMAGE_SIZE)
    assert out.shape == (256, 10)
    assert jnp.allclose(out, ref, atol=1e-4, rtol=1e-4), "f32 mismatch vs reference"
    assert jnp.allclose(jnp.exp(out).sum(axis=1), 1.0, atol=1e-4)

    # bf16 compute path with a ragged batch (exercises wrapper-side padding).
    x2 = jax.random.normal(kx2, (200, 1, 8, 8), dtype=jnp.float32)
    out2 = jax.block_until_ready(
        model_f_forward(x2, params, image_size=IMAGE_SIZE, batch_tile=128,
                        compute_dtype=jnp.bfloat16))
    ref2 = reference_forward(x2, params, IMAGE_SIZE)
    assert out2.shape == (200, 10)
    assert jnp.allclose(out2, ref2, atol=3e-2, rtol=3e-2), "bf16 mismatch vs reference"

    print("KERNEL_OK")
</pallas_src>

<mosaic_0001>
module attributes {stable_mosaic.version = 11 : i64} {
  func.func @_mlp_kernel(%arg0: i32, %arg1: memref<128x64xf32, #tpu.memory_space<vmem>>, %arg2: memref<64x128xf32, #tpu.memory_space<vmem>>, %arg3: memref<1x128xf32, #tpu.memory_space<vmem>>, %arg4: memref<128x64xf32, #tpu.memory_space<vmem>>, %arg5: memref<1x64xf32, #tpu.memory_space<vmem>>, %arg6: memref<64x10xf32, #tpu.memory_space<vmem>>, %arg7: memref<1x10xf32, #tpu.memory_space<vmem>>, %arg8: memref<10x10xf32, #tpu.memory_space<vmem>>, %arg9: memref<1x10xf32, #tpu.memory_space<vmem>>, %arg10: memref<10x10xf32, #tpu.memory_space<vmem>>, %arg11: memref<1x10xf32, #tpu.memory_space<vmem>>, %arg12: memref<10x128xf32, #tpu.memory_space<vmem>>, %arg13: memref<1x128xf32, #tpu.memory_space<vmem>>, %arg14: memref<128x128xf32, #tpu.memory_space<vmem>>) attributes {dimension_semantics = [#tpu.dimension_semantics<parallel>], iteration_bounds = array<i64: 2>, scalar_prefetch = 0 : i64, scratch_operands = 0 : i64, tpu.core_type = #tpu.core_type<tc>, window_params = [{transform_indices = @transform_0, window_bounds = array<i64: 128, 64>}, {pipeline_mode = #tpu.pipeline_mode<synchronous>, transform_indices = @transform_1, window_bounds = array<i64: 64, 128>}, {pipeline_mode = #tpu.pipeline_mode<synchronous>, transform_indices = @transform_2, window_bounds = array<i64: 1, 128>}, {pipeline_mode = #tpu.pipeline_mode<synchronous>, transform_indices = @transform_3, window_bounds = array<i64: 128, 64>}, {pipeline_mode = #tpu.pipeline_mode<synchronous>, transform_indices = @transform_4, window_bounds = array<i64: 1, 64>}, {pipeline_mode = #tpu.pipeline_mode<synchronous>, transform_indices = @transform_5, window_bounds = array<i64: 64, 10>}, {pipeline_mode = #tpu.pipeline_mode<synchronous>, transform_indices = @transform_6, window_bounds = array<i64: 1, 10>}, {pipeline_mode = #tpu.pipeline_mode<synchronous>, transform_indices = @transform_7, window_bounds = array<i64: 10, 10>}, {pipeline_mode = #tpu.pipeline_mode<synchronous>, transform_indices = @transform_8, window_bounds = array<i64: 1, 10>}, {pipeline_mode = #tpu.pipeline_mode<synchronous>, transform_indices = @transform_9, window_bounds = array<i64: 10, 10>}, {pipeline_mode = #tpu.pipeline_mode<synchronous>, transform_indices = @transform_10, window_bounds = array<i64: 1, 10>}, {pipeline_mode = #tpu.pipeline_mode<synchronous>, transform_indices = @transform_11, window_bounds = array<i64: 10, 128>}, {pipeline_mode = #tpu.pipeline_mode<synchronous>, transform_indices = @transform_12, window_bounds = array<i64: 1, 128>}, {transform_indices = @transform_13, window_bounds = array<i64: 128, 128>}]} {
    %c0 = arith.constant 0 : index
    %c0_0 = arith.constant 0 : index
    %0 = vector.load %arg1[%c0, %c0_0] : memref<128x64xf32, #tpu.memory_space<vmem>>, vector<128x64xf32>
    %c0_1 = arith.constant 0 : index
    %c0_2 = arith.constant 0 : index
    %1 = vector.load %arg2[%c0_1, %c0_2] : memref<64x128xf32, #tpu.memory_space<vmem>>, vector<64x128xf32>
    %cst = arith.constant dense<0.000000e+00> : vector<128x128xf32>
    %2 = tpu.matmul %0, %1, %cst {dimension_numbers = #tpu.dot_dimension_numbers<[1], [0], [0], [1], [0, 0, 1, 1], [], []>} : vector<128x64xf32>, vector<64x128xf32>, vector<128x128xf32> -> vector<128x128xf32>
    %c0_3 = arith.constant 0 : index
    %c0_4 = arith.constant 0 : index
    %3 = vector.load %arg3[%c0_3, %c0_4] : memref<1x128xf32, #tpu.memory_space<vmem>>, vector<1x128xf32>
    %4 = vector.broadcast %3 : vector<1x128xf32> to vector<128x128xf32>
    %5 = arith.addf %2, %4 : vector<128x128xf32>
    %cst_5 = arith.constant 5.000000e-01 : f32
    %6 = vector.broadcast %cst_5 : f32 to vector<128x128xf32>
    %7 = arith.mulf %6, %5 : vector<128x128xf32>
    %8 = math.tanh %7 : vector<128x128xf32>
    %cst_6 = arith.constant 5.000000e-01 : f32
    %9 = vector.broadcast %cst_6 : f32 to vector<128x128xf32>
    %10 = arith.mulf %9, %8 : vector<128x128xf32>
    %cst_7 = arith.constant 5.000000e-01 : f32
    %11 = vector.broadcast %cst_7 : f32 to vector<128x128xf32>
    %12 = arith.addf %10, %11 : vector<128x128xf32>
    %c0_8 = arith.constant 0 : index
    %c0_9 = arith.constant 0 : index
    %13 = vector.load %arg4[%c0_8, %c0_9] : memref<128x64xf32, #tpu.memory_space<vmem>>, vector<128x64xf32>
    %cst_10 = arith.constant dense<0.000000e+00> : vector<128x64xf32>
    %14 = tpu.matmul %12, %13, %cst_10 {dimension_numbers = #tpu.dot_dimension_numbers<[1], [0], [0], [1], [0, 0, 1, 1], [], []>} : vector<128x128xf32>, vector<128x64xf32>, vector<128x64xf32> -> vector<128x64xf32>
    %c0_11 = arith.constant 0 : index
    %c0_12 = arith.constant 0 : index
    %15 = vector.load %arg5[%c0_11, %c0_12] : memref<1x64xf32, #tpu.memory_space<vmem>>, vector<1x64xf32>
    %16 = vector.broadcast %15 : vector<1x64xf32> to vector<128x64xf32>
    %17 = arith.addf %14, %16 : vector<128x64xf32>
    %cst_13 = arith.constant 5.000000e-01 : f32
    %18 = vector.broadcast %cst_13 : f32 to vector<128x64xf32>
    %19 = arith.mulf %18, %17 : vector<128x64xf32>
    %20 = math.tanh %19 : vector<128x64xf32>
    %cst_14 = arith.constant 5.000000e-01 : f32
    %21 = vector.broadcast %cst_14 : f32 to vector<128x64xf32>
    %22 = arith.mulf %21, %20 : vector<128x64xf32>
    %cst_15 = arith.constant 5.000000e-01 : f32
    %23 = vector.broadcast %cst_15 : f32 to vector<128x64xf32>
    %24 = arith.addf %22, %23 : vector<128x64xf32>
    %c0_16 = arith.constant 0 : index
    %c0_17 = arith.constant 0 : index
    %25 = vector.load %arg6[%c0_16, %c0_17] : memref<64x10xf32, #tpu.memory_space<vmem>>, vector<64x10xf32>
    %cst_18 = arith.constant dense<0.000000e+00> : vector<128x10xf32>
    %26 = tpu.matmul %24, %25, %cst_18 {dimension_numbers = #tpu.dot_dimension_numbers<[1], [0], [0], [1], [0, 0, 1, 1], [], []>} : vector<128x64xf32>, vector<64x10xf32>, vector<128x10xf32> -> vector<128x10xf32>
    %c0_19 = arith.constant 0 : index
    %c0_20 = arith.constant 0 : index
    %27 = vector.load %arg7[%c0_19, %c0_20] : memref<1x10xf32, #tpu.memory_space<vmem>>, vector<1x10xf32>
    %28 = vector.broadcast %27 : vector<1x10xf32> to vector<128x10xf32>
    %29 = arith.addf %26, %28 : vector<128x10xf32>
    %cst_21 = arith.constant 5.000000e-01 : f32
    %30 = vector.broadcast %cst_21 : f32 to vector<128x10xf32>
    %31 = arith.mulf %30, %29 : vector<128x10xf32>
    %32 = math.tanh %31 : vector<128x10xf32>
    %cst_22 = arith.constant 5.000000e-01 : f32
    %33 = vector.broadcast %cst_22 : f32 to vector<128x10xf32>
    %34 = arith.mulf %33, %32 : vector<128x10xf32>
    %cst_23 = arith.constant 5.000000e-01 : f32
    %35 = vector.broadcast %cst_23 : f32 to vector<128x10xf32>
    %36 = arith.addf %34, %35 : vector<128x10xf32>
    %c0_24 = arith.constant 0 : index
    %c0_25 = arith.constant 0 : index
    %37 = vector.load %arg8[%c0_24, %c0_25] : memref<10x10xf32, #tpu.memory_space<vmem>>, vector<10x10xf32>
    %cst_26 = arith.constant dense<0.000000e+00> : vector<128x10xf32>
    %38 = tpu.matmul %36, %37, %cst_26 {dimension_numbers = #tpu.dot_dimension_numbers<[1], [0], [0], [1], [0, 0, 1, 1], [], []>} : vector<128x10xf32>, vector<10x10xf32>, vector<128x10xf32> -> vector<128x10xf32>
    %c0_27 = arith.constant 0 : index
    %c0_28 = arith.constant 0 : index
    %39 = vector.load %arg9[%c0_27, %c0_28] : memref<1x10xf32, #tpu.memory_space<vmem>>, vector<1x10xf32>
    %40 = vector.broadcast %39 : vector<1x10xf32> to vector<128x10xf32>
    %41 = arith.addf %38, %40 : vector<128x10xf32>
    %cst_29 = arith.constant 5.000000e-01 : f32
    %42 = vector.broadcast %cst_29 : f32 to vector<128x10xf32>
    %43 = arith.mulf %42, %41 : vector<128x10xf32>
    %44 = math.tanh %43 : vector<128x10xf32>
    %cst_30 = arith.constant 5.000000e-01 : f32
    %45 = vector.broadcast %cst_30 : f32 to vector<128x10xf32>
    %46 = arith.mulf %45, %44 : vector<128x10xf32>
    %cst_31 = arith.constant 5.000000e-01 : f32
    %47 = vector.broadcast %cst_31 : f32 to vector<128x10xf32>
    %48 = arith.addf %46, %47 : vector<128x10xf32>
    %c0_32 = arith.constant 0 : index
    %c0_33 = arith.constant 0 : index
    %49 = vector.load %arg10[%c0_32, %c0_33] : memref<10x10xf32, #tpu.memory_space<vmem>>, vector<10x10xf32>
    %cst_34 = arith.constant dense<0.000000e+00> : vector<128x10xf32>
    %50 = tpu.matmul %48, %49, %cst_34 {dimension_numbers = #tpu.dot_dimension_numbers<[1], [0], [0], [1], [0, 0, 1, 1], [], []>} : vector<128x10xf32>, vector<10x10xf32>, vector<128x10xf32> -> vector<128x10xf32>
    %c0_35 = arith.constant 0 : index
    %c0_36 = arith.constant 0 : index
    %51 = vector.load %arg11[%c0_35, %c0_36] : memref<1x10xf32, #tpu.memory_space<vmem>>, vector<1x10xf32>
    %52 = vector.broadcast %51 : vector<1x10xf32> to vector<128x10xf32>
    %53 = arith.addf %50, %52 : vector<128x10xf32>
    %cst_37 = arith.constant 5.000000e-01 : f32
    %54 = vector.broadcast %cst_37 : f32 to vector<128x10xf32>
    %55 = arith.mulf %54, %53 : vector<128x10xf32>
    %56 = math.tanh %55 : vector<128x10xf32>
    %cst_38 = arith.constant 5.000000e-01 : f32
    %57 = vector.broadcast %cst_38 : f32 to vector<128x10xf32>
    %58 = arith.mulf %57, %56 : vector<128x10xf32>
    %cst_39 = arith.constant 5.000000e-01 : f32
    %59 = vector.broadcast %cst_39 : f32 to vector<128x10xf32>
    %60 = arith.addf %58, %59 : vector<128x10xf32>
    %c0_40 = arith.constant 0 : index
    %c0_41 = arith.constant 0 : index
    %61 = vector.load %arg12[%c0_40, %c0_41] : memref<10x128xf32, #tpu.memory_space<vmem>>, vector<10x128xf32>
    %cst_42 = arith.constant dense<0.000000e+00> : vector<128x128xf32>
    %62 = tpu.matmul %60, %61, %cst_42 {dimension_numbers = #tpu.dot_dimension_numbers<[1], [0], [0], [1], [0, 0, 1, 1], [], []>} : vector<128x10xf32>, vector<10x128xf32>, vector<128x128xf32> -> vector<128x128xf32>
    %c0_43 = arith.constant 0 : index
    %c0_44 = arith.constant 0 : index
    %63 = vector.load %arg13[%c0_43, %c0_44] : memref<1x128xf32, #tpu.memory_space<vmem>>, vector<1x128xf32>
    %64 = vector.broadcast %63 : vector<1x128xf32> to vector<128x128xf32>
    %65 = arith.addf %62, %64 : vector<128x128xf32>
    %66 = tpu.iota {dimensions = array<i32: 1>} : vector<128x128xi32>
    %c10_i32 = arith.constant 10 : i32
    %67 = vector.broadcast %c10_i32 : i32 to vector<128x128xi32>
    %68 = arith.cmpi slt, %66, %67 : vector<128x128xi32>
    %cst_45 = arith.constant -1.000000e+30 : f32
    %69 = vector.broadcast %cst_45 : f32 to vector<128x128xf32>
    %70 = arith.select %68, %65, %69 : vector<128x128xi1>, vector<128x128xf32>
    %cst_46 = arith.constant dense<0xFF800000> : vector<128xf32>
    %71 = vector.multi_reduction <maximumf>, %70, %cst_46 [1] : vector<128x128xf32> to vector<128xf32>
    %72 = vector.shape_cast %71 : vector<128xf32> to vector<128x1xf32>
    %73 = vector.broadcast %72 : vector<128x1xf32> to vector<128x128xf32>
    %74 = arith.subf %70, %73 : vector<128x128xf32>
    %75 = math.exp %74 : vector<128x128xf32>
    %cst_47 = arith.constant 0.000000e+00 : f32
    %76 = vector.broadcast %cst_47 : f32 to vector<128x128xf32>
    %77 = arith.select %68, %75, %76 : vector<128x128xi1>, vector<128x128xf32>
    %cst_48 = arith.constant dense<0.000000e+00> : vector<128xf32>
    %78 = vector.multi_reduction <add>, %77, %cst_48 [1] : vector<128x128xf32> to vector<128xf32>
    %79 = vector.shape_cast %78 : vector<128xf32> to vector<128x1xf32>
    %80 = math.log %79 : vector<128x1xf32>
    %81 = vector.broadcast %80 : vector<128x1xf32> to vector<128x128xf32>
    %82 = arith.subf %74, %81 : vector<128x128xf32>
    %c0_49 = arith.constant 0 : index
    %c0_50 = arith.constant 0 : index
    %83 = vector.load %arg14[%c0_49, %c0_50] : memref<128x128xf32, #tpu.memory_space<vmem>>, vector<128x128xf32>
    tpu.vector_store %arg14[%c0_49, %c0_50], %82 {strides = array<i32>} : memref<128x128xf32, #tpu.memory_space<vmem>>, vector<128x128xf32>,
    return
  }
  func.func @transform_0(%arg0: i32) -> (i32, i32) {
    %c0_i32 = arith.constant 0 : i32
    %c0_i32_0 = arith.constant 0 : i32
    return %arg0, %c0_i32 : i32, i32
  }
  func.func @transform_1(%arg0: i32) -> (i32, i32) {
    %c0_i32 = arith.constant 0 : i32
    %c0_i32_0 = arith.constant 0 : i32
    %c0_i32_1 = arith.constant 0 : i32
    return %c0_i32, %c0_i32_0 : i32, i32
  }
  func.func @transform_2(%arg0: i32) -> (i32, i32) {
    %c0_i32 = arith.constant 0 : i32
    %c0_i32_0 = arith.constant 0 : i32
    %c0_i32_1 = arith.constant 0 : i32
    return %c0_i32, %c0_i32_0 : i32, i32
  }
  func.func @transform_3(%arg0: i32) -> (i32, i32) {
    %c0_i32 = arith.constant 0 : i32
    %c0_i32_0 = arith.constant 0 : i32
    %c0_i32_1 = arith.constant 0 : i32
    return %c0_i32, %c0_i32_0 : i32, i32
  }
  func.func @transform_4(%arg0: i32) -> (i32, i32) {
    %c0_i32 = arith.constant 0 : i32
    %c0_i32_0 = arith.constant 0 : i32
    %c0_i32_1 = arith.constant 0 : i32
    return %c0_i32, %c0_i32_0 : i32, i32
  }
  func.func @transform_5(%arg0: i32) -> (i32, i32) {
    %c0_i32 = arith.constant 0 : i32
    %c0_i32_0 = arith.constant 0 : i32
    %c0_i32_1 = arith.constant 0 : i32
    return %c0_i32, %c0_i32_0 : i32, i32
  }
  func.func @transform_6(%arg0: i32) -> (i32, i32) {
    %c0_i32 = arith.constant 0 : i32
    %c0_i32_0 = arith.constant 0 : i32
    %c0_i32_1 = arith.constant 0 : i32
    return %c0_i32, %c0_i32_0 : i32, i32
  }
  func.func @transform_7(%arg0: i32) -> (i32, i32) {
    %c0_i32 = arith.constant 0 : i32
    %c0_i32_0 = arith.constant 0 : i32
    %c0_i32_1 = arith.constant 0 : i32
    return %c0_i32, %c0_i32_0 : i32, i32
  }
  func.func @transform_8(%arg0: i32) -> (i32, i32) {
    %c0_i32 = arith.constant 0 : i32
    %c0_i32_0 = arith.constant 0 : i32
    %c0_i32_1 = arith.constant 0 : i32
    return %c0_i32, %c0_i32_0 : i32, i32
  }
  func.func @transform_9(%arg0: i32) -> (i32, i32) {
    %c0_i32 = arith.constant 0 : i32
    %c0_i32_0 = arith.constant 0 : i32
    %c0_i32_1 = arith.constant 0 : i32
    return %c0_i32, %c0_i32_0 : i32, i32
  }
  func.func @transform_10(%arg0: i32) -> (i32, i32) {
    %c0_i32 = arith.constant 0 : i32
    %c0_i32_0 = arith.constant 0 : i32
    %c0_i32_1 = arith.constant 0 : i32
    return %c0_i32, %c0_i32_0 : i32, i32
  }
  func.func @transform_11(%arg0: i32) -> (i32, i32) {
    %c0_i32 = arith.constant 0 : i32
    %c0_i32_0 = arith.constant 0 : i32
    %c0_i32_1 = arith.constant 0 : i32
    return %c0_i32, %c0_i32_0 : i32, i32
  }
  func.func @transform_12(%arg0: i32) -> (i32, i32) {
    %c0_i32 = arith.constant 0 : i32
    %c0_i32_0 = arith.constant 0 : i32
    %c0_i32_1 = arith.constant 0 : i32
    return %c0_i32, %c0_i32_0 : i32, i32
  }
  func.func @transform_13(%arg0: i32) -> (i32, i32) {
    %c0_i32 = arith.constant 0 : i32
    %c0_i32_0 = arith.constant 0 : i32
    return %arg0, %c0_i32 : i32, i32
  }
}

</mosaic_0001>

<llo_original>
// kernel: tpu_custom_call.1
$region0: #{tpu_custom_call.1}
  #allocation0 [shape = 'u32[]', space=smem, size = 0x4, offset = 0x4, fixed_abs, tag = 'smem constant byte address 0x4 - core index']
  #allocation1 [shape = 'u32[72,128]{1,0:T(1,128)}', space=vmem, size = 0x9000, scoped, tag = 'internal scratch']
  %s0 = inlined_call_operand.vmem [shape: f32[256,64], index: 0, kind: input, shape index: {}]
  %s1 = inlined_call_operand.vmem [shape: f32[64,128], index: 1, kind: input, shape index: {}]
  %s2 = inlined_call_operand.vmem [shape: f32[1,128], index: 2, kind: input, shape index: {}]
  %s3 = inlined_call_operand.vmem [shape: f32[128,64], index: 3, kind: input, shape index: {}]
  %s4 = inlined_call_operand.vmem [shape: f32[1,64], index: 4, kind: input, shape index: {}]
  %s5 = inlined_call_operand.vmem [shape: f32[64,10], index: 5, kind: input, shape index: {}]
  %s6 = inlined_call_operand.vmem [shape: f32[1,10], index: 6, kind: input, shape index: {}]
  %s7 = inlined_call_operand.vmem [shape: f32[10,10], index: 7, kind: input, shape index: {}]
  %s8 = inlined_call_operand.vmem [shape: f32[1,10], index: 8, kind: input, shape index: {}]
  %s9 = inlined_call_operand.vmem [shape: f32[10,10], index: 9, kind: input, shape index: {}]
  %s10 = inlined_call_operand.vmem [shape: f32[1,10], index: 10, kind: input, shape index: {}]
  %s11 = inlined_call_operand.vmem [shape: f32[10,128], index: 11, kind: input, shape index: {}]
  %s12 = inlined_call_operand.vmem [shape: f32[1,128], index: 12, kind: input, shape index: {}]
  %s13 = inlined_call_operand.hbm [shape: f32[256,128], index: 13, kind: output, shape index: {}]
  %s14 = sld [smem:[#allocation0]]
  $region85: #{tpu_custom_call.1} parent=0
    _
  %s16 = ssub.s32 1, %s14
  %s17 = scalar_select 0, %s16, %s14
  $region1: #{tpu_custom_call.1} parent=0
    #allocation2 [shape = 'u8[131072]{0}', space=vmem, size = 0x20000, scoped, tag = 'output window, operand 0']
    #allocation3 [shape = 's32[2]{0}', space=sflag, size = 0x8, scoped, tag = 'scoped memory for tpu_custom_call.1']
    %18 = vsyncpa [#allocation3], 0
    %s19 = scalar_lea.sflag [#allocation3], 1
    %20 = vsyncpa %s19, 0
    loop: start=0, step=1, limit=4
    $region2: #{tpu_custom_call.1} parent=1 // loop_pre_header
      _
    $region3: #{tpu_custom_call.1} parent=1 // loop_header
      %s22 = sphi 0, %s26
      %p23 = scmp.ge.s32.totalorder %s22, 4
      %s32 = sphi 0, %s34
      %s35 = sphi 0, %s32
      %s36 = sphi 0, %s35
      %s52 = sphi 0, %s36
      %s56 = sphi 0, %s56
      %s58 = sphi 0, %s56
      %s59 = sphi 0, %s58
      %s73 = sphi 0, %s59
      %s77 = sphi 0, %s77
      %s79 = sphi 0, %s77
      %s80 = sphi 0, %s79
      %s94 = sphi 0, %s80
      %s98 = sphi 0, %s98
      %s100 = sphi 0, %s98
      %s101 = sphi 0, %s100
      %s115 = sphi 0, %s101
      %s119 = sphi 0, %s119
      %s121 = sphi 0, %s119
      %s122 = sphi 0, %s121
      %s136 = sphi 0, %s122
      %s140 = sphi 0, %s140
      %s142 = sphi 0, %s140
      %s143 = sphi 0, %s142
      %s157 = sphi 0, %s143
      %s161 = sphi 0, %s161
      %s163 = sphi 0, %s161
      %s164 = sphi 0, %s163
      %s178 = sphi 0, %s164
      %s182 = sphi 0, %s182
      %s184 = sphi 0, %s182
      %s185 = sphi 0, %s184
      %s199 = sphi 0, %s185
      %s203 = sphi 0, %s203
      %s205 = sphi 0, %s203
      %s206 = sphi 0, %s205
      %s220 = sphi 0, %s206
      %s224 = sphi 0, %s224
      %s226 = sphi 0, %s224
      %s227 = sphi 0, %s226
      %s241 = sphi 0, %s227
      %s245 = sphi 0, %s245
      %s247 = sphi 0, %s245
      %s248 = sphi 0, %s247
      %s262 = sphi 0, %s248
      %s266 = sphi 0, %s266
      %s268 = sphi 0, %s266
      %s269 = sphi 0, %s268
      %s283 = sphi 0, %s269
      %s287 = sphi 0, %s287
      %s289 = sphi 0, %s287
      %s290 = sphi 0, %s289
      %s304 = sphi 0, %s290
      %s310 = sphi 0, %s312
      %s313 = sphi 0, %s310
      %s314 = sphi 0, %s313
      %s330 = sphi 0, %s314
    $region4: #{tpu_custom_call.1} parent=1 // loop_header_branch
      %25 = sbr.rel (%p23) target = $region8
    $region5: #{tpu_custom_call.1} parent=1 // loop_body
      %s27 = ssub.s32 %s22, 1
      %s28 = ssub.s32 %s22, 2
      %s29 = sadd.s32 %s22, 1
      %s30 = ssub.s32 %s22, %s29
      %p31 = scmp.eq.s32.totalorder %s30, 0
      %s33 = sadd.s32 %s32, 1
      %s34 = scalar_select %p31, %s32, %s33
      %p37 = pneg %p31
      %p38 = scmp.eq.s32.totalorder %s22, 1
      %p39 = por %p37, %p38
      %p40 = scmp.ne.s32.totalorder %s32, %s35
      %p41 = scmp.eq.s32.totalorder %s22, 0
      %p42 = por %p40, %p41
      %p43 = scmp.ne.s32.totalorder %s32, %s35
      %p44 = scmp.eq.s32.totalorder %s27, 1
      %p45 = por %p43, %p44
      %p46 = scmp.ne.s32.totalorder %s35, %s36
      %p47 = scmp.eq.s32.totalorder %s27, 0
      %p48 = por %p46, %p47
      %p49 = scmp.ne.s32.totalorder %s35, %s36
      %p50 = scmp.eq.s32.totalorder %s28, 1
      %p51 = por %p49, %p50
      %p53 = scmp.ne.s32.totalorder %s36, %s52
      %p54 = scmp.eq.s32.totalorder %s28, 0
      %p55 = por %p53, %p54
      %s57 = sadd.s32 %s56, 1
      %p60 = scmp.eq.s32.totalorder %s22, 1
      %p61 = scmp.ne.s32.totalorder %s56, %s58
      %p62 = scmp.eq.s32.totalorder %s22, 0
      %p63 = por %p61, %p62
      %p64 = scmp.ne.s32.totalorder %s56, %s58
      %p65 = scmp.eq.s32.totalorder %s27, 1
      %p66 = por %p64, %p65
      %p67 = scmp.ne.s32.totalorder %s58, %s59
      %p68 = scmp.eq.s32.totalorder %s27, 0
      %p69 = por %p67, %p68
      %p70 = scmp.ne.s32.totalorder %s58, %s59
      %p71 = scmp.eq.s32.totalorder %s28, 1
      %p72 = por %p70, %p71
      %p74 = scmp.ne.s32.totalorder %s59, %s73
      %p75 = scmp.eq.s32.totalorder %s28, 0
      %p76 = por %p74, %p75
      %s78 = sadd.s32 %s77, 1
      %p81 = scmp.eq.s32.totalorder %s22, 1
      %p82 = scmp.ne.s32.totalorder %s77, %s79
      %p83 = scmp.eq.s32.totalorder %s22, 0
      %p84 = por %p82, %p83
      %p85 = scmp.ne.s32.totalorder %s77, %s79
      %p86 = scmp.eq.s32.totalorder %s27, 1
      %p87 = por %p85, %p86
      %p88 = scmp.ne.s32.totalorder %s79, %s80
      %p89 = scmp.eq.s32.totalorder %s27, 0
      %p90 = por %p88, %p89
      %p91 = scmp.ne.s32.totalorder %s79, %s80
      %p92 = scmp.eq.s32.totalorder %s28, 1
      %p93 = por %p91, %p92
      %p95 = scmp.ne.s32.totalorder %s80, %s94
      %p96 = scmp.eq.s32.totalorder %s28, 0
      %p97 = por %p95, %p96
      %s99 = sadd.s32 %s98, 1
      %p102 = scmp.eq.s32.totalorder %s22, 1
      %p103 = scmp.ne.s32.totalorder %s98, %s100
      %p104 = scmp.eq.s32.totalorder %s22, 0
      %p105 = por %p103, %p104
      %p106 = scmp.ne.s32.totalorder %s98, %s100
      %p107 = scmp.eq.s32.totalorder %s27, 1
      %p108 = por %p106, %p107
      %p109 = scmp.ne.s32.totalorder %s100, %s101
      %p110 = scmp.eq.s32.totalorder %s27, 0
      %p111 = por %p109, %p110
      %p112 = scmp.ne.s32.totalorder %s100, %s101
      %p113 = scmp.eq.s32.totalorder %s28, 1
      %p114 = por %p112, %p113
      %p116 = scmp.ne.s32.totalorder %s101, %s115
      %p117 = scmp.eq.s32.totalorder %s28, 0
      %p118 = por %p116, %p117
      %s120 = sadd.s32 %s119, 1
      %p123 = scmp.eq.s32.totalorder %s22, 1
      %p124 = scmp.ne.s32.totalorder %s119, %s121
      %p125 = scmp.eq.s32.totalorder %s22, 0
      %p126 = por %p124, %p125
      %p127 = scmp.ne.s32.totalorder %s119, %s121
      %p128 = scmp.eq.s32.totalorder %s27, 1
      %p129 = por %p127, %p128
      %p130 = scmp.ne.s32.totalorder %s121, %s122
      %p131 = scmp.eq.s32.totalorder %s27, 0
      %p132 = por %p130, %p131
      %p133 = scmp.ne.s32.totalorder %s121, %s122
      %p134 = scmp.eq.s32.totalorder %s28, 1
      %p135 = por %p133, %p134
      %p137 = scmp.ne.s32.totalorder %s122, %s136
      %p138 = scmp.eq.s32.totalorder %s28, 0
      %p139 = por %p137, %p138
      %s141 = sadd.s32 %s140, 1
      %p144 = scmp.eq.s32.totalorder %s22, 1
      %p145 = scmp.ne.s32.totalorder %s140, %s142
      %p146 = scmp.eq.s32.totalorder %s22, 0
      %p147 = por %p145, %p146
      %p148 = scmp.ne.s32.totalorder %s140, %s142
      %p149 = scmp.eq.s32.totalorder %s27, 1
      %p150 = por %p148, %p149
      %p151 = scmp.ne.s32.totalorder %s142, %s143
      %p152 = scmp.eq.s32.totalorder %s27, 0
      %p153 = por %p151, %p152
      %p154 = scmp.ne.s32.totalorder %s142, %s143
      %p155 = scmp.eq.s32.totalorder %s28, 1
      %p156 = por %p154, %p155
      %p158 = scmp.ne.s32.totalorder %s143, %s157
      %p159 = scmp.eq.s32.totalorder %s28, 0
      %p160 = por %p158, %p159
      %s162 = sadd.s32 %s161, 1
      %p165 = scmp.eq.s32.totalorder %s22, 1
      %p166 = scmp.ne.s32.totalorder %s161, %s163
      %p167 = scmp.eq.s32.totalorder %s22, 0
      %p168 = por %p166, %p167
      %p169 = scmp.ne.s32.totalorder %s161, %s163
      %p170 = scmp.eq.s32.totalorder %s27, 1
      %p171 = por %p169, %p170
      %p172 = scmp.ne.s32.totalorder %s163, %s164
      %p173 = scmp.eq.s32.totalorder %s27, 0
      %p174 = por %p172, %p173
      %p175 = scmp.ne.s32.totalorder %s163, %s164
      %p176 = scmp.eq.s32.totalorder %s28, 1
      %p177 = por %p175, %p176
      %p179 = scmp.ne.s32.totalorder %s164, %s178
      %p180 = scmp.eq.s32.totalorder %s28, 0
      %p181 = por %p179, %p180
      %s183 = sadd.s32 %s182, 1
      %p186 = scmp.eq.s32.totalorder %s22, 1
      %p187 = scmp.ne.s32.totalorder %s182, %s184
      %p188 = scmp.eq.s32.totalorder %s22, 0
      %p189 = por %p187, %p188
      %p190 = scmp.ne.s32.totalorder %s182, %s184
      %p191 = scmp.eq.s32.totalorder %s27, 1
      %p192 = por %p190, %p191
      %p193 = scmp.ne.s32.totalorder %s184, %s185
      %p194 = scmp.eq.s32.totalorder %s27, 0
      %p195 = por %p193, %p194
      %p196 = scmp.ne.s32.totalorder %s184, %s185
      %p197 = scmp.eq.s32.totalorder %s28, 1
      %p198 = por %p196, %p197
      %p200 = scmp.ne.s32.totalorder %s185, %s199
      %p201 = scmp.eq.s32.totalorder %s28, 0
      %p202 = por %p200, %p201
      %s204 = sadd.s32 %s203, 1
      %p207 = scmp.eq.s32.totalorder %s22, 1
      %p208 = scmp.ne.s32.totalorder %s203, %s205
      %p209 = scmp.eq.s32.totalorder %s22, 0
      %p210 = por %p208, %p209
      %p211 = scmp.ne.s32.totalorder %s203, %s205
      %p212 = scmp.eq.s32.totalorder %s27, 1
      %p213 = por %p211, %p212
      %p214 = scmp.ne.s32.totalorder %s205, %s206
      %p215 = scmp.eq.s32.totalorder %s27, 0
      %p216 = por %p214, %p215
      %p217 = scmp.ne.s32.totalorder %s205, %s206
      %p218 = scmp.eq.s32.totalorder %s28, 1
      %p219 = por %p217, %p218
      %p221 = scmp.ne.s32.totalorder %s206, %s220
      %p222 = scmp.eq.s32.totalorder %s28, 0
      %p223 = por %p221, %p222
      %s225 = sadd.s32 %s224, 1
      %p228 = scmp.eq.s32.totalorder %s22, 1
      %p229 = scmp.ne.s32.totalorder %s224, %s226
      %p230 = scmp.eq.s32.totalorder %s22, 0
      %p231 = por %p229, %p230
      %p232 = scmp.ne.s32.totalorder %s224, %s226
      %p233 = scmp.eq.s32.totalorder %s27, 1
      %p234 = por %p232, %p233
      %p235 = scmp.ne.s32.totalorder %s226, %s227
      %p236 = scmp.eq.s32.totalorder %s27, 0
      %p237 = por %p235, %p236
      %p238 = scmp.ne.s32.totalorder %s226, %s227
      %p239 = scmp.eq.s32.totalorder %s28, 1
      %p240 = por %p238, %p239
      %p242 = scmp.ne.s32.totalorder %s227, %s241
      %p243 = scmp.eq.s32.totalorder %s28, 0
      %p244 = por %p242, %p243
      %s246 = sadd.s32 %s245, 1
      %p249 = scmp.eq.s32.totalorder %s22, 1
      %p250 = scmp.ne.s32.totalorder %s245, %s247
      %p251 = scmp.eq.s32.totalorder %s22, 0
      %p252 = por %p250, %p251
      %p253 = scmp.ne.s32.totalorder %s245, %s247
      %p254 = scmp.eq.s32.totalorder %s27, 1
      %p255 = por %p253, %p254
      %p256 = scmp.ne.s32.totalorder %s247, %s248
      %p257 = scmp.eq.s32.totalorder %s27, 0
      %p258 = por %p256, %p257
      %p259 = scmp.ne.s32.totalorder %s247, %s248
      %p260 = scmp.eq.s32.totalorder %s28, 1
      %p261 = por %p259, %p260
      %p263 = scmp.ne.s32.totalorder %s248, %s262
      %p264 = scmp.eq.s32.totalorder %s28, 0
      %p265 = por %p263, %p264
      %s267 = sadd.s32 %s266, 1
      %p270 = scmp.eq.s32.totalorder %s22, 1
      %p271 = scmp.ne.s32.totalorder %s266, %s268
      %p272 = scmp.eq.s32.totalorder %s22, 0
      %p273 = por %p271, %p272
      %p274 = scmp.ne.s32.totalorder %s266, %s268
      %p275 = scmp.eq.s32.totalorder %s27, 1
      %p276 = por %p274, %p275
      %p277 = scmp.ne.s32.totalorder %s268, %s269
      %p278 = scmp.eq.s32.totalorder %s27, 0
      %p279 = por %p277, %p278
      %p280 = scmp.ne.s32.totalorder %s268, %s269
      %p281 = scmp.eq.s32.totalorder %s28, 1
      %p282 = por %p280, %p281
      %p284 = scmp.ne.s32.totalorder %s269, %s283
      %p285 = scmp.eq.s32.totalorder %s28, 0
      %p286 = por %p284, %p285
      %s288 = sadd.s32 %s287, 1
      %p291 = scmp.eq.s32.totalorder %s22, 1
      %p292 = scmp.ne.s32.totalorder %s287, %s289
      %p293 = scmp.eq.s32.totalorder %s22, 0
      %p294 = por %p292, %p293
      %p295 = scmp.ne.s32.totalorder %s287, %s289
      %p296 = scmp.eq.s32.totalorder %s27, 1
      %p297 = por %p295, %p296
      %p298 = scmp.ne.s32.totalorder %s289, %s290
      %p299 = scmp.eq.s32.totalorder %s27, 0
      %p300 = por %p298, %p299
      %p301 = scmp.ne.s32.totalorder %s289, %s290
      %p302 = scmp.eq.s32.totalorder %s28, 1
      %p303 = por %p301, %p302
      %p305 = scmp.ne.s32.totalorder %s290, %s304
      %p306 = scmp.eq.s32.totalorder %s28, 0
      %p307 = por %p305, %p306
      %s308 = ssub.s32 %s22, %s29
      %p309 = scmp.eq.s32.totalorder %s308, 0
      %s311 = sadd.s32 %s310, 1
      %s312 = scalar_select %p309, %s310, %s311
      %p315 = pneg %p309
      %p316 = scmp.eq.s32.totalorder %s22, 1
      %p317 = por %p315, %p316
      %p318 = scmp.ne.s32.totalorder %s310, %s313
      %p319 = scmp.eq.s32.totalorder %s22, 0
      %p320 = por %p318, %p319
      %p321 = scmp.ne.s32.totalorder %s310, %s313
      %p322 = scmp.eq.s32.totalorder %s27, 1
      %p323 = por %p321, %p322
      %p324 = scmp.ne.s32.totalorder %s313, %s314
      %p325 = scmp.eq.s32.totalorder %s27, 0
      %p326 = por %p324, %p325
      %p327 = scmp.ne.s32.totalorder %s313, %s314
      %p328 = scmp.eq.s32.totalorder %s28, 1
      %p329 = por %p327, %p328
      %p331 = scmp.ne.s32.totalorder %s314, %s330
      %p332 = scmp.eq.s32.totalorder %s28, 0
      %p333 = por %p331, %p332
      %p334 = scmp.le.s32.totalorder 1, %s22
      %p335 = scmp.lt.s32.totalorder %s22, 3
      %p336 = pnand %p334, %p335
      %p337 = pneg %p336
      // Predicated region
      $region9: #{tpu_custom_call.1} parent=5 // pred_check
        _
      $region10: #{tpu_custom_call.1} parent=5 // pred_check_branch
        %339 = sbr.rel (%p336) target = $region12
      $region11: #{tpu_custom_call.1} parent=5 // pred_region
        %s340 = ssub.s32 %s22, 1
        // Predicated region
        $region13: #{tpu_custom_call.1} parent=11 // pred_check
          %p341 = pneg %p69
        $region14: #{tpu_custom_call.1} parent=11 // pred_check_branch
          %343 = sbr.rel (%p341) target = $region16
        $region15: #{tpu_custom_call.1} parent=11 // pred_region
          _
        $region16: #{tpu_custom_call.1} parent=11 // pred_fallthru
          _
        // Predicated region
        $region17: #{tpu_custom_call.1} parent=11 // pred_check
          %p344 = pneg %p90
        $region18: #{tpu_custom_call.1} parent=11 // pred_check_branch
          %346 = sbr.rel (%p344) target = $region20
        $region19: #{tpu_custom_call.1} parent=11 // pred_region
          _
        $region20: #{tpu_custom_call.1} parent=11 // pred_fallthru
          _
        // Predicated region
        $region21: #{tpu_custom_call.1} parent=11 // pred_check
          %p347 = pneg %p111
        $region22: #{tpu_custom_call.1} parent=11 // pred_check_branch
          %349 = sbr.rel (%p347) target = $region24
        $region23: #{tpu_custom_call.1} parent=11 // pred_region
          _
        $region24: #{tpu_custom_call.1} parent=11 // pred_fallthru
          _
        // Predicated region
        $region25: #{tpu_custom_call.1} parent=11 // pred_check
          %p350 = pneg %p132
        $region26: #{tpu_custom_call.1} parent=11 // pred_check_branch
          %352 = sbr.rel (%p350) target = $region28
        $region27: #{tpu_custom_call.1} parent=11 // pred_region
          _
        $region28: #{tpu_custom_call.1} parent=11 // pred_fallthru
          _
        // Predicated region
        $region29: #{tpu_custom_call.1} parent=11 // pred_check
          %p353 = pneg %p153
        $region30: #{tpu_custom_call.1} parent=11 // pred_check_branch
          %355 = sbr.rel (%p353) target = $region32
        $region31: #{tpu_custom_call.1} parent=11 // pred_region
          _
        $region32: #{tpu_custom_call.1} parent=11 // pred_fallthru
          _
        // Predicated region
        $region33: #{tpu_custom_call.1} parent=11 // pred_check
          %p356 = pneg %p174
        $region34: #{tpu_custom_call.1} parent=11 // pred_check_branch
          %358 = sbr.rel (%p356) target = $region36
        $region35: #{tpu_custom_call.1} parent=11 // pred_region
          _
        $region36: #{tpu_custom_call.1} parent=11 // pred_fallthru
          _
        // Predicated region
        $region37: #{tpu_custom_call.1} parent=11 // pred_check
          %p359 = pneg %p195
        $region38: #{tpu_custom_call.1} parent=11 // pred_check_branch
          %361 = sbr.rel (%p359) target = $region40
        $region39: #{tpu_custom_call.1} parent=11 // pred_region
          _
        $region40: #{tpu_custom_call.1} parent=11 // pred_fallthru
          _
        // Predicated region
        $region41: #{tpu_custom_call.1} parent=11 // pred_check
          %p362 = pneg %p216
        $region42: #{tpu_custom_call.1} parent=11 // pred_check_branch
          %364 = sbr.rel (%p362) target = $region44
        $region43: #{tpu_custom_call.1} parent=11 // pred_region
          _
        $region44: #{tpu_custom_call.1} parent=11 // pred_fallthru
          _
        // Predicated region
        $region45: #{tpu_custom_call.1} parent=11 // pred_check
          %p365 = pneg %p237
        $region46: #{tpu_custom_call.1} parent=11 // pred_check_branch
          %367 = sbr.rel (%p365) target = $region48
        $region47: #{tpu_custom_call.1} parent=11 // pred_region
          _
        $region48: #{tpu_custom_call.1} parent=11 // pred_fallthru
          _
        // Predicated region
        $region49: #{tpu_custom_call.1} parent=11 // pred_check
          %p368 = pneg %p258
        $region50: #{tpu_custom_call.1} parent=11 // pred_check_branch
          %370 = sbr.rel (%p368) target = $region52
        $region51: #{tpu_custom_call.1} parent=11 // pred_region
          _
        $region52: #{tpu_custom_call.1} parent=11 // pred_fallthru
          _
        // Predicated region
        $region53: #{tpu_custom_call.1} parent=11 // pred_check
          %p371 = pneg %p279
        $region54: #{tpu_custom_call.1} parent=11 // pred_check_branch
          %373 = sbr.rel (%p371) target = $region56
        $region55: #{tpu_custom_call.1} parent=11 // pred_region
          _
        $region56: #{tpu_custom_call.1} parent=11 // pred_fallthru
          _
        // Predicated region
        $region57: #{tpu_custom_call.1} parent=11 // pred_check
          %p374 = pneg %p300
        $region58: #{tpu_custom_call.1} parent=11 // pred_check_branch
          %376 = sbr.rel (%p374) target = $region60
        $region59: #{tpu_custom_call.1} parent=11 // pred_region
          _
        $region60: #{tpu_custom_call.1} parent=11 // pred_fallthru
          _
      $region12: #{tpu_custom_call.1} parent=5 // pred_fallthru
        _
      %p377 = scmp.lt.s32.totalorder %s22, 2
      // Predicated region
      $region61: #{tpu_custom_call.1} parent=5 // pred_check
        %p378 = pneg %p377
      $region62: #{tpu_custom_call.1} parent=5 // pred_check_branch
        %380 = sbr.rel (%p378) target = $region64
      $region63: #{tpu_custom_call.1} parent=5 // pred_region
        // Predicated region
        $region65: #{tpu_custom_call.1} parent=63 // pred_check
          %p381 = pneg %p42
        $region66: #{tpu_custom_call.1} parent=63 // pred_check_branch
          %383 = sbr.rel (%p381) target = $region68
        $region67: #{tpu_custom_call.1} parent=63 // pred_region
          %s384 = smul.u32 16, %s22
          %p385 = scmp.lt.s32.totalorder %s384, 31
          %s386 = scalar_select %p385, %s384, 31
          %s387 = smul.addr %s386, 8
          %s388 = scalar_lea.vmem %s0, %s387
          %s389 = smul.u32 16, %s22
        $region68: #{tpu_custom_call.1} parent=63 // pred_fallthru
          _
      $region64: #{tpu_custom_call.1} parent=5 // pred_fallthru
        _
      %p390 = scmp.le.s32.totalorder 1, %s22
      %p391 = scmp.lt.s32.totalorder %s22, 3
      %p392 = pnand %p390, %p391
      %p393 = pneg %p392
      // Predicated region
      $region69: #{tpu_custom_call.1} parent=5 // pred_check
        _
      $region70: #{tpu_custom_call.1} parent=5 // pred_check_branch
        %395 = sbr.rel (%p392) target = $region72
      $region71: #{tpu_custom_call.1} parent=5 // pred_region
        %s396 = ssub.s32 %s22, 1
        %s397 = smul.u32 16, %s27
        %p398 = scmp.lt.s32.totalorder %s397, 31
        %s399 = scalar_select %p398, %s397, 31
        %s400 = smul.addr %s399, 8
        %s401 = scalar_lea.vmem %s0, %s400
        %p402 = pneg %p48
        %p403 = pneg %p45
        %p404 = pneg %p69
        %p405 = pneg %p66
        %p406 = pneg %p90
        %p407 = pneg %p87
        %p408 = pneg %p111
        %p409 = pneg %p108
        %p410 = pneg %p132
        %p411 = pneg %p129
        %p412 = pneg %p153
        %p413 = pneg %p150
        %p414 = pneg %p174
        %p415 = pneg %p171
        %p416 = pneg %p195
        %p417 = pneg %p192
        %p418 = pneg %p216
        %p419 = pneg %p213
        %p420 = pneg %p237
        %p421 = pneg %p234
        %p422 = pneg %p258
        %p423 = pneg %p255
        %p424 = pneg %p279
        %p425 = pneg %p276
        %p426 = pneg %p300
        %p427 = pneg %p297
        %p428 = pneg %p326
        %p429 = pneg %p323
        %s430 = sand.u32 %s313, 1
        %s431 = scalar_lea.sflag [#allocation3], %s430
        %s432 = sand.u32 %s313, 1
        %s433 = smul.addr %s432, 128
        %s434 = scalar_lea.vmem [#allocation2], %s433
        %s435 = smul.u32 16, %s27
        %p436 = scmp.lt.s32.totalorder %s435, 31
        %s437 = scalar_select %p436, %s435, 31
        %s438 = smul.addr %s437, 8
        %s439 = scalar_lea.vmem %s0, %s438
        %s440 = smul.u32 16, %s27
        %s441 = smul.u32 16, %s27
        %v442 = vld [vmem:[%s439] sm:$0xff]
        %v443 = vld [vmem:[%s439 + $0x8] sm:$0xff]
        %v444 = vld [vmem:[%s439 + $0x10] sm:$0xff]
        %v445 = vld [vmem:[%s439 + $0x18] sm:$0xff]
        %v446 = vld [vmem:[%s439 + $0x20] sm:$0xff]
        %v447 = vld [vmem:[%s439 + $0x28] sm:$0xff]
        %v448 = vld [vmem:[%s439 + $0x30] sm:$0xff]
        %v449 = vld [vmem:[%s439 + $0x38] sm:$0xff]
        %v450 = vld [vmem:[%s439 + $0x40] sm:$0xff]
        %v451 = vld [vmem:[%s439 + $0x48] sm:$0xff]
        %v452 = vld [vmem:[%s439 + $0x50] sm:$0xff]
        %v453 = vld [vmem:[%s439 + $0x58] sm:$0xff]
        %v454 = vld [vmem:[%s439 + $0x60] sm:$0xff]
        %v455 = vld [vmem:[%s439 + $0x68] sm:$0xff]
        %v456 = vld [vmem:[%s439 + $0x70] sm:$0xff]
        %v457 = vld [vmem:[%s439 + $0x78] sm:$0xff]
        %v458 = vld [vmem:[%s1] sm:$0xff]
        %v459 = vld [vmem:[%s1 + $0x8] sm:$0xff]
        %v460 = vld [vmem:[%s1 + $0x10] sm:$0xff]
        %v461 = vld [vmem:[%s1 + $0x18] sm:$0xff]
        %v462 = vld [vmem:[%s1 + $0x20] sm:$0xff]
        %v463 = vld [vmem:[%s1 + $0x28] sm:$0xff]
        %v464 = vld [vmem:[%s1 + $0x30] sm:$0xff]
        %v465 = vld [vmem:[%s1 + $0x38] sm:$0xff]
        %v466 = vld [vmem:[%s2] sm:$0x1]
        %v468 = vperm.slane %v466, 0
        %vm470 = vcmask 523264
        %v472 = vsel %vm470, %v442, 0
        %v475 = vsel %vm470, %v443, 0
        %v478 = vsel %vm470, %v444, 0
        %v481 = vsel %vm470, %v445, 0
        %v484 = vsel %vm470, %v446, 0
        %v487 = vsel %vm470, %v447, 0
        %v490 = vsel %vm470, %v448, 0
        %v493 = vsel %vm470, %v449, 0
        %v496 = vsel %vm470, %v450, 0
        %v499 = vsel %vm470, %v451, 0
        %v502 = vsel %vm470, %v452, 0
        %v505 = vsel %vm470, %v453, 0
        %v508 = vsel %vm470, %v454, 0
        %v511 = vsel %vm470, %v455, 0
        %v514 = vsel %vm470, %v456, 0
        %v517 = vsel %vm470, %v457, 0
        %519 = vmatpush.msra.mxu0 0.0
        %520 = vmatpush.msra.mxu0 0.0
        %521 = vmatpush.msra.mxu0 0.0
        %522 = vmatpush.msra.mxu0 0.0
        %523 = vmatpush.msra.mxu0 0.0
        %524 = vmatpush.msra.mxu0 0.0
        %525 = vmatpush.msra.mxu0 0.0
        %526 = vmatpush.msra.mxu0 0.0
        %527 = vmatpush.msra.mxu0 %v465
        %528 = vmatpush.msra.mxu0 %v464
        %529 = vmatpush.msra.mxu0 %v463
        %530 = vmatpush.msra.mxu0 %v462
        %531 = vmatpush.msra.mxu0 %v461
        %532 = vmatpush.msra.mxu0 %v460
        %533 = vmatpush.msra.mxu0 %v459
        %534 = vmatpush.msra.mxu0 %v458
        %535 = vmatmul.f32.gmra.mxu0 %v472
        %v536 = vpop.f32.mrf.mxu0
        %v537 = vadd.f32 %v468, %v536
        %538 = vmatmul.f32.gmra.mxu0 %v475
        %v539 = vpop.f32.mrf.mxu0
        %v540 = vadd.f32 %v468, %v539
        %541 = vmatmul.f32.gmra.mxu0 %v478
        %v542 = vpop.f32.mrf.mxu0
        %v543 = vadd.f32 %v468, %v542
        %544 = vmatmul.f32.gmra.mxu0 %v481
        %v545 = vpop.f32.mrf.mxu0
        %v546 = vadd.f32 %v468, %v545
        %547 = vmatmul.f32.gmra.mxu0 %v484
        %v548 = vpop.f32.mrf.mxu0
        %v549 = vadd.f32 %v468, %v548
        %550 = vmatmul.f32.gmra.mxu0 %v487
        %v551 = vpop.f32.mrf.mxu0
        %v552 = vadd.f32 %v468, %v551
        %553 = vmatmul.f32.gmra.mxu0 %v490
        %v554 = vpop.f32.mrf.mxu0
        %v555 = vadd.f32 %v468, %v554
        %556 = vmatmul.f32.gmra.mxu0 %v493
        %v557 = vpop.f32.mrf.mxu0
        %v558 = vadd.f32 %v468, %v557
        %559 = vmatmul.f32.gmra.mxu0 %v496
        %v560 = vpop.f32.mrf.mxu0
        %v561 = vadd.f32 %v468, %v560
        %562 = vmatmul.f32.gmra.mxu0 %v499
        %v563 = vpop.f32.mrf.mxu0
        %v564 = vadd.f32 %v468, %v563
        %565 = vmatmul.f32.gmra.mxu0 %v502
        %v566 = vpop.f32.mrf.mxu0
        %v567 = vadd.f32 %v468, %v566
        %568 = vmatmul.f32.gmra.mxu0 %v505
        %v569 = vpop.f32.mrf.mxu0
        %v570 = vadd.f32 %v468, %v569
        %571 = vmatmul.f32.gmra.mxu0 %v508
        %v572 = vpop.f32.mrf.mxu0
        %v573 = vadd.f32 %v468, %v572
        %574 = vmatmul.f32.gmra.mxu0 %v511
        %v575 = vpop.f32.mrf.mxu0
        %v576 = vadd.f32 %v468, %v575
        %577 = vmatmul.f32.gmra.mxu0 %v514
        %v578 = vpop.f32.mrf.mxu0
        %v579 = vadd.f32 %v468, %v578
        %580 = vmatmul.f32.gmra.mxu0 %v517
        %v581 = vpop.f32.mrf.mxu0
        %v582 = vadd.f32 %v468, %v581
        %583 = vdwg.mxu0
        %v584 = vmul.f32 %v537, 0.5
        %v585 = vmul.f32 %v540, 0.5
        %v586 = vmul.f32 %v543, 0.5
        %v587 = vmul.f32 %v546, 0.5
        %v588 = vmul.f32 %v549, 0.5
        %v589 = vmul.f32 %v552, 0.5
        %v590 = vmul.f32 %v555, 0.5
        %v591 = vmul.f32 %v558, 0.5
        %v592 = vmul.f32 %v561, 0.5
        %v593 = vmul.f32 %v564, 0.5
        %v594 = vmul.f32 %v567, 0.5
        %v595 = vmul.f32 %v570, 0.5
        %v596 = vmul.f32 %v573, 0.5
        %v597 = vmul.f32 %v576, 0.5
        %v598 = vmul.f32 %v579, 0.5
        %v599 = vmul.f32 %v582, 0.5
        %v600 = vtanh.pop %v584
        %v601 = vtanh.pop %v585
        %v602 = vtanh.pop %v586
        %v603 = vtanh.pop %v587
        %v604 = vtanh.pop %v588
        %v605 = vtanh.pop %v589
        %v606 = vtanh.pop %v590
        %v607 = vtanh.pop %v591
        %v608 = vtanh.pop %v592
        %v609 = vtanh.pop %v593
        %v610 = vtanh.pop %v594
        %v611 = vtanh.pop %v595
        %v612 = vtanh.pop %v596
        %v613 = vtanh.pop %v597
        %v614 = vtanh.pop %v598
        %v615 = vtanh.pop %v599
        %v616 = vmul.f32 %v600, 0.5
        %v617 = vmul.f32 %v601, 0.5
        %v618 = vmul.f32 %v602, 0.5
        %v619 = vmul.f32 %v603, 0.5
        %v620 = vmul.f32 %v604, 0.5
        %v621 = vmul.f32 %v605, 0.5
        %v622 = vmul.f32 %v606, 0.5
        %v623 = vmul.f32 %v607, 0.5
        %v624 = vmul.f32 %v608, 0.5
        %v625 = vmul.f32 %v609, 0.5
        %v626 = vmul.f32 %v610, 0.5
        %v627 = vmul.f32 %v611, 0.5
        %v628 = vmul.f32 %v612, 0.5
        %v629 = vmul.f32 %v613, 0.5
        %v630 = vmul.f32 %v614, 0.5
        %v631 = vmul.f32 %v615, 0.5
        %v632 = vadd.f32 %v616, 0.5
        %v633 = vadd.f32 %v617, 0.5
        %v634 = vadd.f32 %v618, 0.5
        %v635 = vadd.f32 %v619, 0.5
        %v636 = vadd.f32 %v620, 0.5
        %v637 = vadd.f32 %v621, 0.5
        %v638 = vadd.f32 %v622, 0.5
        %v639 = vadd.f32 %v623, 0.5
        %v640 = vadd.f32 %v624, 0.5
        %v641 = vadd.f32 %v625, 0.5
        %v642 = vadd.f32 %v626, 0.5
        %v643 = vadd.f32 %v627, 0.5
        %v644 = vadd.f32 %v628, 0.5
        %v645 = vadd.f32 %v629, 0.5
        %v646 = vadd.f32 %v630, 0.5
        %v647 = vadd.f32 %v631, 0.5
        %v648 = vld [vmem:[%s3] sm:$0xff]
        %v649 = vld [vmem:[%s3 + $0x8] sm:$0xff]
        %v650 = vld [vmem:[%s3 + $0x10] sm:$0xff]
        %v651 = vld [vmem:[%s3 + $0x18] sm:$0xff]
        %v652 = vld [vmem:[%s3 + $0x20] sm:$0xff]
        %v653 = vld [vmem:[%s3 + $0x28] sm:$0xff]
        %v654 = vld [vmem:[%s3 + $0x30] sm:$0xff]
        %v655 = vld [vmem:[%s3 + $0x38] sm:$0xff]
        %v656 = vld [vmem:[%s3 + $0x40] sm:$0xff]
        %v657 = vld [vmem:[%s3 + $0x48] sm:$0xff]
        %v658 = vld [vmem:[%s3 + $0x50] sm:$0xff]
        %v659 = vld [vmem:[%s3 + $0x58] sm:$0xff]
        %v660 = vld [vmem:[%s3 + $0x60] sm:$0xff]
        %v661 = vld [vmem:[%s3 + $0x68] sm:$0xff]
        %v662 = vld [vmem:[%s3 + $0x70] sm:$0xff]
        %v663 = vld [vmem:[%s3 + $0x78] sm:$0xff]
        %v664 = vld [vmem:[%s4] sm:$0x1]
        %v666 = vperm.slane %v664, 0
        %668 = vmatpush.msra.mxu0 %v663
        %669 = vmatpush.msra.mxu0 %v662
        %670 = vmatpush.msra.mxu0 %v661
        %671 = vmatpush.msra.mxu0 %v660
        %672 = vmatpush.msra.mxu0 %v659
        %673 = vmatpush.msra.mxu0 %v658
        %674 = vmatpush.msra.mxu0 %v657
        %675 = vmatpush.msra.mxu0 %v656
        %676 = vmatpush.msra.mxu0 %v655
        %677 = vmatpush.msra.mxu0 %v654
        %678 = vmatpush.msra.mxu0 %v653
        %679 = vmatpush.msra.mxu0 %v652
        %680 = vmatpush.msra.mxu0 %v651
        %681 = vmatpush.msra.mxu0 %v650
        %682 = vmatpush.msra.mxu0 %v649
        %683 = vmatpush.msra.mxu0 %v648
        %684 = vmatmul.f32.gmra.mxu0 %v632
        %v685 = vpop.f32.mrf.mxu0
        %v686 = vadd.f32 %v666, %v685
        %687 = vmatmul.f32.gmra.mxu0 %v633
        %v688 = vpop.f32.mrf.mxu0
        %v689 = vadd.f32 %v666, %v688
        %690 = vmatmul.f32.gmra.mxu0 %v634
        %v691 = vpop.f32.mrf.mxu0
        %v692 = vadd.f32 %v666, %v691
        %693 = vmatmul.f32.gmra.mxu0 %v635
        %v694 = vpop.f32.mrf.mxu0
        %v695 = vadd.f32 %v666, %v694
        %696 = vmatmul.f32.gmra.mxu0 %v636
        %v697 = vpop.f32.mrf.mxu0
        %v698 = vadd.f32 %v666, %v697
        %699 = vmatmul.f32.gmra.mxu0 %v637
        %v700 = vpop.f32.mrf.mxu0
        %v701 = vadd.f32 %v666, %v700
        %702 = vmatmul.f32.gmra.mxu0 %v638
        %v703 = vpop.f32.mrf.mxu0
        %v704 = vadd.f32 %v666, %v703
        %705 = vmatmul.f32.gmra.mxu0 %v639
        %v706 = vpop.f32.mrf.mxu0
        %v707 = vadd.f32 %v666, %v706
        %708 = vmatmul.f32.gmra.mxu0 %v640
        %v709 = vpop.f32.mrf.mxu0
        %v710 = vadd.f32 %v666, %v709
        %711 = vmatmul.f32.gmra.mxu0 %v641
        %v712 = vpop.f32.mrf.mxu0
        %v713 = vadd.f32 %v666, %v712
        %714 = vmatmul.f32.gmra.mxu0 %v642
        %v715 = vpop.f32.mrf.mxu0
        %v716 = vadd.f32 %v666, %v715
        %717 = vmatmul.f32.gmra.mxu0 %v643
        %v718 = vpop.f32.mrf.mxu0
        %v719 = vadd.f32 %v666, %v718
        %720 = vmatmul.f32.gmra.mxu0 %v644
        %v721 = vpop.f32.mrf.mxu0
        %v722 = vadd.f32 %v666, %v721
        %723 = vmatmul.f32.gmra.mxu0 %v645
        %v724 = vpop.f32.mrf.mxu0
        %v725 = vadd.f32 %v666, %v724
        %726 = vmatmul.f32.gmra.mxu0 %v646
        %v727 = vpop.f32.mrf.mxu0
        %v728 = vadd.f32 %v666, %v727
        %729 = vmatmul.f32.gmra.mxu0 %v647
        %v730 = vpop.f32.mrf.mxu0
        %v731 = vadd.f32 %v666, %v730
        %732 = vdwg.mxu0
        %v733 = vmul.f32 %v686, 0.5
        %v734 = vmul.f32 %v689, 0.5
        %v735 = vmul.f32 %v692, 0.5
        %v736 = vmul.f32 %v695, 0.5
        %v737 = vmul.f32 %v698, 0.5
        %v738 = vmul.f32 %v701, 0.5
        %v739 = vmul.f32 %v704, 0.5
        %v740 = vmul.f32 %v707, 0.5
        %v741 = vmul.f32 %v710, 0.5
        %v742 = vmul.f32 %v713, 0.5
        %v743 = vmul.f32 %v716, 0.5
        %v744 = vmul.f32 %v719, 0.5
        %v745 = vmul.f32 %v722, 0.5
        %v746 = vmul.f32 %v725, 0.5
        %v747 = vmul.f32 %v728, 0.5
        %v748 = vmul.f32 %v731, 0.5
        %v749 = vtanh.pop %v733
        %v750 = vtanh.pop %v734
        %v751 = vtanh.pop %v735
        %v752 = vtanh.pop %v736
        %v753 = vtanh.pop %v737
        %v754 = vtanh.pop %v738
        %v755 = vtanh.pop %v739
        %v756 = vtanh.pop %v740
        %v757 = vtanh.pop %v741
        %v758 = vtanh.pop %v742
        %v759 = vtanh.pop %v743
        %v760 = vtanh.pop %v744
        %v761 = vtanh.pop %v745
        %v762 = vtanh.pop %v746
        %v763 = vtanh.pop %v747
        %v764 = vtanh.pop %v748
        %v765 = vmul.f32 %v749, 0.5
        %v766 = vmul.f32 %v750, 0.5
        %v767 = vmul.f32 %v751, 0.5
        %v768 = vmul.f32 %v752, 0.5
        %v769 = vmul.f32 %v753, 0.5
        %v770 = vmul.f32 %v754, 0.5
        %v771 = vmul.f32 %v755, 0.5
        %v772 = vmul.f32 %v756, 0.5
        %v773 = vmul.f32 %v757, 0.5
        %v774 = vmul.f32 %v758, 0.5
        %v775 = vmul.f32 %v759, 0.5
        %v776 = vmul.f32 %v760, 0.5
        %v777 = vmul.f32 %v761, 0.5
        %v778 = vmul.f32 %v762, 0.5
        %v779 = vmul.f32 %v763, 0.5
        %v780 = vmul.f32 %v764, 0.5
        %v781 = vadd.f32 %v765, 0.5
        %v782 = vadd.f32 %v766, 0.5
        %v783 = vadd.f32 %v767, 0.5
        %v784 = vadd.f32 %v768, 0.5
        %v785 = vadd.f32 %v769, 0.5
        %v786 = vadd.f32 %v770, 0.5
        %v787 = vadd.f32 %v771, 0.5
        %v788 = vadd.f32 %v772, 0.5
        %v789 = vadd.f32 %v773, 0.5
        %v790 = vadd.f32 %v774, 0.5
        %v791 = vadd.f32 %v775, 0.5
        %v792 = vadd.f32 %v776, 0.5
        %v793 = vadd.f32 %v777, 0.5
        %v794 = vadd.f32 %v778, 0.5
        %v795 = vadd.f32 %v779, 0.5
        %v796 = vadd.f32 %v780, 0.5
        %v797 = vld [vmem:[%s5] sm:$0xff]
        %v798 = vld [vmem:[%s5 + $0x8] sm:$0xff]
        %v799 = vld [vmem:[%s5 + $0x10] sm:$0xff]
        %v800 = vld [vmem:[%s5 + $0x18] sm:$0xff]
        %v801 = vld [vmem:[%s5 + $0x20] sm:$0xff]
        %v802 = vld [vmem:[%s5 + $0x28] sm:$0xff]
        %v803 = vld [vmem:[%s5 + $0x30] sm:$0xff]
        %v804 = vld [vmem:[%s5 + $0x38] sm:$0xff]
        %v805 = vld [vmem:[%s6] sm:$0x1]
        %v807 = vperm.slane %v805, 0
        %v810 = vsel %vm470, %v781, 0
        %v813 = vsel %vm470, %v782, 0
        %v816 = vsel %vm470, %v783, 0
        %v819 = vsel %vm470, %v784, 0
        %v822 = vsel %vm470, %v785, 0
        %v825 = vsel %vm470, %v786, 0
        %v828 = vsel %vm470, %v787, 0
        %v831 = vsel %vm470, %v788, 0
        %v834 = vsel %vm470, %v789, 0
        %v837 = vsel %vm470, %v790, 0
        %v840 = vsel %vm470, %v791, 0
        %v843 = vsel %vm470, %v792, 0
        %v846 = vsel %vm470, %v793, 0
        %v849 = vsel %vm470, %v794, 0
        %v852 = vsel %vm470, %v795, 0
        %v855 = vsel %vm470, %v796, 0
        %857 = vmatpush.msra.mxu0 0.0
        %858 = vmatpush.msra.mxu0 0.0
        %859 = vmatpush.msra.mxu0 0.0
        %860 = vmatpush.msra.mxu0 0.0
        %861 = vmatpush.msra.mxu0 0.0
        %862 = vmatpush.msra.mxu0 0.0
        %863 = vmatpush.msra.mxu0 0.0
        %864 = vmatpush.msra.mxu0 0.0
        %865 = vmatpush.msra.mxu0 %v804
        %866 = vmatpush.msra.mxu0 %v803
        %867 = vmatpush.msra.mxu0 %v802
        %868 = vmatpush.msra.mxu0 %v801
        %869 = vmatpush.msra.mxu0 %v800
        %870 = vmatpush.msra.mxu0 %v799
        %871 = vmatpush.msra.mxu0 %v798
        %872 = vmatpush.msra.mxu0 %v797
        %873 = vmatmul.f32.gmra.mxu0 %v810
        %v874 = vpop.f32.mrf.mxu0
        %v875 = vadd.f32 %v807, %v874
        %876 = vmatmul.f32.gmra.mxu0 %v813
        %v877 = vpop.f32.mrf.mxu0
        %v878 = vadd.f32 %v807, %v877
        %879 = vmatmul.f32.gmra.mxu0 %v816
        %v880 = vpop.f32.mrf.mxu0
        %v881 = vadd.f32 %v807, %v880
        %882 = vmatmul.f32.gmra.mxu0 %v819
        %v883 = vpop.f32.mrf.mxu0
        %v884 = vadd.f32 %v807, %v883
        %885 = vmatmul.f32.gmra.mxu0 %v822
        %v886 = vpop.f32.mrf.mxu0
        %v887 = vadd.f32 %v807, %v886
        %888 = vmatmul.f32.gmra.mxu0 %v825
        %v889 = vpop.f32.mrf.mxu0
        %v890 = vadd.f32 %v807, %v889
        %891 = vmatmul.f32.gmra.mxu0 %v828
        %v892 = vpop.f32.mrf.mxu0
        %v893 = vadd.f32 %v807, %v892
        %894 = vmatmul.f32.gmra.mxu0 %v831
        %v895 = vpop.f32.mrf.mxu0
        %v896 = vadd.f32 %v807, %v895
        %897 = vmatmul.f32.gmra.mxu0 %v834
        %v898 = vpop.f32.mrf.mxu0
        %v899 = vadd.f32 %v807, %v898
        %900 = vmatmul.f32.gmra.mxu0 %v837
        %v901 = vpop.f32.mrf.mxu0
        %v902 = vadd.f32 %v807, %v901
        %903 = vmatmul.f32.gmra.mxu0 %v840
        %v904 = vpop.f32.mrf.mxu0
        %v905 = vadd.f32 %v807, %v904
        %906 = vmatmul.f32.gmra.mxu0 %v843
        %v907 = vpop.f32.mrf.mxu0
        %v908 = vadd.f32 %v807, %v907
        %909 = vmatmul.f32.gmra.mxu0 %v846
        %v910 = vpop.f32.mrf.mxu0
        %v911 = vadd.f32 %v807, %v910
        %912 = vmatmul.f32.gmra.mxu0 %v849
        %v913 = vpop.f32.mrf.mxu0
        %v914 = vadd.f32 %v807, %v913
        %915 = vmatmul.f32.gmra.mxu0 %v852
        %v916 = vpop.f32.mrf.mxu0
        %v917 = vadd.f32 %v807, %v916
        %918 = vmatmul.f32.gmra.mxu0 %v855
        %v919 = vpop.f32.mrf.mxu0
        %v920 = vadd.f32 %v807, %v919
        %921 = vdwg.mxu0
        %v922 = vmul.f32 %v875, 0.5
        %v923 = vmul.f32 %v878, 0.5
        %v924 = vmul.f32 %v881, 0.5
        %v925 = vmul.f32 %v884, 0.5
        %v926 = vmul.f32 %v887, 0.5
        %v927 = vmul.f32 %v890, 0.5
        %v928 = vmul.f32 %v893, 0.5
        %v929 = vmul.f32 %v896, 0.5
        %v930 = vmul.f32 %v899, 0.5
        %v931 = vmul.f32 %v902, 0.5
        %v932 = vmul.f32 %v905, 0.5
        %v933 = vmul.f32 %v908, 0.5
        %v934 = vmul.f32 %v911, 0.5
        %v935 = vmul.f32 %v914, 0.5
        %v936 = vmul.f32 %v917, 0.5
        %v937 = vmul.f32 %v920, 0.5
        %v938 = vtanh.pop %v922
        %v939 = vtanh.pop %v923
        %v940 = vtanh.pop %v924
        %v941 = vtanh.pop %v925
        %v942 = vtanh.pop %v926
        %v943 = vtanh.pop %v927
        %v944 = vtanh.pop %v928
        %v945 = vtanh.pop %v929
        %v946 = vtanh.pop %v930
        %v947 = vtanh.pop %v931
        %v948 = vtanh.pop %v932
        %v949 = vtanh.pop %v933
        %v950 = vtanh.pop %v934
        %v951 = vtanh.pop %v935
        %v952 = vtanh.pop %v936
        %v953 = vtanh.pop %v937
        %v954 = vmul.f32 %v938, 0.5
        %v955 = vmul.f32 %v939, 0.5
        %v956 = vmul.f32 %v940, 0.5
        %v957 = vmul.f32 %v941, 0.5
        %v958 = vmul.f32 %v942, 0.5
        %v959 = vmul.f32 %v943, 0.5
        %v960 = vmul.f32 %v944, 0.5
        %v961 = vmul.f32 %v945, 0.5
        %v962 = vmul.f32 %v946, 0.5
        %v963 = vmul.f32 %v947, 0.5
        %v964 = vmul.f32 %v948, 0.5
        %v965 = vmul.f32 %v949, 0.5
        %v966 = vmul.f32 %v950, 0.5
        %v967 = vmul.f32 %v951, 0.5
        %v968 = vmul.f32 %v952, 0.5
        %v969 = vmul.f32 %v953, 0.5
        %v970 = vadd.f32 %v954, 0.5
        %v971 = vadd.f32 %v955, 0.5
        %v972 = vadd.f32 %v956, 0.5
        %v973 = vadd.f32 %v957, 0.5
        %v974 = vadd.f32 %v958, 0.5
        %v975 = vadd.f32 %v959, 0.5
        %v976 = vadd.f32 %v960, 0.5
        %v977 = vadd.f32 %v961, 0.5
        %v978 = vadd.f32 %v962, 0.5
        %v979 = vadd.f32 %v963, 0.5
        %v980 = vadd.f32 %v964, 0.5
        %v981 = vadd.f32 %v965, 0.5
        %v982 = vadd.f32 %v966, 0.5
        %v983 = vadd.f32 %v967, 0.5
        %v984 = vadd.f32 %v968, 0.5
        %v985 = vadd.f32 %v969, 0.5
        %v986 = vld [vmem:[%s7] sm:$0xff]
        %v987 = vld [vmem:[%s7 + $0x8] sm:$0x3]
        %v988 = vld [vmem:[%s8] sm:$0x1]
        %v990 = vperm.slane %v988, 0
        %vm992 = vcmask 80896
        %v994 = vsel %vm992, %v970, 0
        %v997 = vsel %vm992, %v971, 0
        %v1000 = vsel %vm992, %v972, 0
        %v1003 = vsel %vm992, %v973, 0
        %v1006 = vsel %vm992, %v974, 0
        %v1009 = vsel %vm992, %v975, 0
        %v1012 = vsel %vm992, %v976, 0
        %v1015 = vsel %vm992, %v977, 0
        %v1018 = vsel %vm992, %v978, 0
        %v1021 = vsel %vm992, %v979, 0
        %v1024 = vsel %vm992, %v980, 0
        %v1027 = vsel %vm992, %v981, 0
        %v1030 = vsel %vm992, %v982, 0
        %v1033 = vsel %vm992, %v983, 0
        %v1036 = vsel %vm992, %v984, 0
        %v1039 = vsel %vm992, %v985, 0
        %vm1041 = vcmask 1041408
        %v1043 = vsel %vm1041, %v987, 0
        %1045 = vmatpush.msra.mxu0 0.0
        %1046 = vmatpush.msra.mxu0 0.0
        %1047 = vmatpush.msra.mxu0 0.0
        %1048 = vmatpush.msra.mxu0 0.0
        %1049 = vmatpush.msra.mxu0 0.0
        %1050 = vmatpush.msra.mxu0 0.0
        %1051 = vmatpush.msra.mxu0 0.0
        %1052 = vmatpush.msra.mxu0 0.0
        %1053 = vmatpush.msra.mxu0 0.0
        %1054 = vmatpush.msra.mxu0 0.0
        %1055 = vmatpush.msra.mxu0 0.0
        %1056 = vmatpush.msra.mxu0 0.0
        %1057 = vmatpush.msra.mxu0 0.0
        %1058 = vmatpush.msra.mxu0 0.0
        %1059 = vmatpush.msra.mxu0 %v1043
        %1060 = vmatpush.msra.mxu0 %v986
        %1061 = vmatmul.f32.gmra.mxu0 %v994
        %v1062 = vpop.f32.mrf.mxu0
        %v1063 = vadd.f32 %v990, %v1062
        %1064 = vmatmul.f32.gmra.mxu0 %v997
        %v1065 = vpop.f32.mrf.mxu0
        %v1066 = vadd.f32 %v990, %v1065
        %1067 = vmatmul.f32.gmra.mxu0 %v1000
        %v1068 = vpop.f32.mrf.mxu0
        %v1069 = vadd.f32 %v990, %v1068
        %1070 = vmatmul.f32.gmra.mxu0 %v1003
        %v1071 = vpop.f32.mrf.mxu0
        %v1072 = vadd.f32 %v990, %v1071
        %1073 = vmatmul.f32.gmra.mxu0 %v1006
        %v1074 = vpop.f32.mrf.mxu0
        %v1075 = vadd.f32 %v990, %v1074
        %1076 = vmatmul.f32.gmra.mxu0 %v1009
        %v1077 = vpop.f32.mrf.mxu0
        %v1078 = vadd.f32 %v990, %v1077
        %1079 = vmatmul.f32.gmra.mxu0 %v1012
        %v1080 = vpop.f32.mrf.mxu0
        %v1081 = vadd.f32 %v990, %v1080
        %1082 = vmatmul.f32.gmra.mxu0 %v1015
        %v1083 = vpop.f32.mrf.mxu0
        %v1084 = vadd.f32 %v990, %v1083
        %1085 = vmatmul.f32.gmra.mxu0 %v1018
        %v1086 = vpop.f32.mrf.mxu0
        %v1087 = vadd.f32 %v990, %v1086
        %1088 = vmatmul.f32.gmra.mxu0 %v1021
        %v1089 = vpop.f32.mrf.mxu0
        %v1090 = vadd.f32 %v990, %v1089
        %1091 = vmatmul.f32.gmra.mxu0 %v1024
        %v1092 = vpop.f32.mrf.mxu0
        %v1093 = vadd.f32 %v990, %v1092
        %1094 = vmatmul.f32.gmra.mxu0 %v1027
        %v1095 = vpop.f32.mrf.mxu0
        %v1096 = vadd.f32 %v990, %v1095
        %1097 = vmatmul.f32.gmra.mxu0 %v1030
        %v1098 = vpop.f32.mrf.mxu0
        %v1099 = vadd.f32 %v990, %v1098
        %1100 = vmatmul.f32.gmra.mxu0 %v1033
        %v1101 = vpop.f32.mrf.mxu0
        %v1102 = vadd.f32 %v990, %v1101
        %1103 = vmatmul.f32.gmra.mxu0 %v1036
        %v1104 = vpop.f32.mrf.mxu0
        %v1105 = vadd.f32 %v990, %v1104
        %1106 = vmatmul.f32.gmra.mxu0 %v1039
        %v1107 = vpop.f32.mrf.mxu0
        %v1108 = vadd.f32 %v990, %v1107
        %1109 = vdwg.mxu0
        %v1110 = vmul.f32 %v1063, 0.5
        %v1111 = vmul.f32 %v1066, 0.5
        %v1112 = vmul.f32 %v1069, 0.5
        %v1113 = vmul.f32 %v1072, 0.5
        %v1114 = vmul.f32 %v1075, 0.5
        %v1115 = vmul.f32 %v1078, 0.5
        %v1116 = vmul.f32 %v1081, 0.5
        %v1117 = vmul.f32 %v1084, 0.5
        %v1118 = vmul.f32 %v1087, 0.5
        %v1119 = vmul.f32 %v1090, 0.5
        %v1120 = vmul.f32 %v1093, 0.5
        %v1121 = vmul.f32 %v1096, 0.5
        %v1122 = vmul.f32 %v1099, 0.5
        %v1123 = vmul.f32 %v1102, 0.5
        %v1124 = vmul.f32 %v1105, 0.5
        %v1125 = vmul.f32 %v1108, 0.5
        %v1126 = vtanh.pop %v1110
        %v1127 = vtanh.pop %v1111
        %v1128 = vtanh.pop %v1112
        %v1129 = vtanh.pop %v1113
        %v1130 = vtanh.pop %v1114
        %v1131 = vtanh.pop %v1115
        %v1132 = vtanh.pop %v1116
        %v1133 = vtanh.pop %v1117
        %v1134 = vtanh.pop %v1118
        %v1135 = vtanh.pop %v1119
        %v1136 = vtanh.pop %v1120
        %v1137 = vtanh.pop %v1121
        %v1138 = vtanh.pop %v1122
        %v1139 = vtanh.pop %v1123
        %v1140 = vtanh.pop %v1124
        %v1141 = vtanh.pop %v1125
        %v1142 = vmul.f32 %v1126, 0.5
        %v1143 = vmul.f32 %v1127, 0.5
        %v1144 = vmul.f32 %v1128, 0.5
        %v1145 = vmul.f32 %v1129, 0.5
        %v1146 = vmul.f32 %v1130, 0.5
        %v1147 = vmul.f32 %v1131, 0.5
        %v1148 = vmul.f32 %v1132, 0.5
        %v1149 = vmul.f32 %v1133, 0.5
        %v1150 = vmul.f32 %v1134, 0.5
        %v1151 = vmul.f32 %v1135, 0.5
        %v1152 = vmul.f32 %v1136, 0.5
        %v1153 = vmul.f32 %v1137, 0.5
        %v1154 = vmul.f32 %v1138, 0.5
        %v1155 = vmul.f32 %v1139, 0.5
        %v1156 = vmul.f32 %v1140, 0.5
        %v1157 = vmul.f32 %v1141, 0.5
        %v1158 = vadd.f32 %v1142, 0.5
        %v1159 = vadd.f32 %v1143, 0.5
        %v1160 = vadd.f32 %v1144, 0.5
        %v1161 = vadd.f32 %v1145, 0.5
        %v1162 = vadd.f32 %v1146, 0.5
        %v1163 = vadd.f32 %v1147, 0.5
        %v1164 = vadd.f32 %v1148, 0.5
        %v1165 = vadd.f32 %v1149, 0.5
        %v1166 = vadd.f32 %v1150, 0.5
        %v1167 = vadd.f32 %v1151, 0.5
        %v1168 = vadd.f32 %v1152, 0.5
        %v1169 = vadd.f32 %v1153, 0.5
        %v1170 = vadd.f32 %v1154, 0.5
        %v1171 = vadd.f32 %v1155, 0.5
        %v1172 = vadd.f32 %v1156, 0.5
        %v1173 = vadd.f32 %v1157, 0.5
        %v1174 = vld [vmem:[%s9] sm:$0xff]
        %v1175 = vld [vmem:[%s9 + $0x8] sm:$0x3]
        %v1176 = vld [vmem:[%s10] sm:$0x1]
        %v1178 = vperm.slane %v1176, 0
        %v1181 = vsel %vm992, %v1158, 0
        %v1184 = vsel %vm992, %v1159, 0
        %v1187 = vsel %vm992, %v1160, 0
        %v1190 = vsel %vm992, %v1161, 0
        %v1193 = vsel %vm992, %v1162, 0
        %v1196 = vsel %vm992, %v1163, 0
        %v1199 = vsel %vm992, %v1164, 0
        %v1202 = vsel %vm992, %v1165, 0
        %v1205 = vsel %vm992, %v1166, 0
        %v1208 = vsel %vm992, %v1167, 0
        %v1211 = vsel %vm992, %v1168, 0
        %v1214 = vsel %vm992, %v1169, 0
        %v1217 = vsel %vm992, %v1170, 0
        %v1220 = vsel %vm992, %v1171, 0
        %v1223 = vsel %vm992, %v1172, 0
        %v1226 = vsel %vm992, %v1173, 0
        %v1229 = vsel %vm1041, %v1175, 0
        %1231 = vmatpush.msra.mxu0 0.0
        %1232 = vmatpush.msra.mxu0 0.0
        %1233 = vmatpush.msra.mxu0 0.0
        %1234 = vmatpush.msra.mxu0 0.0
        %1235 = vmatpush.msra.mxu0 0.0
        %1236 = vmatpush.msra.mxu0 0.0
        %1237 = vmatpush.msra.mxu0 0.0
        %1238 = vmatpush.msra.mxu0 0.0
        %1239 = vmatpush.msra.mxu0 0.0
        %1240 = vmatpush.msra.mxu0 0.0
        %1241 = vmatpush.msra.mxu0 0.0
        %1242 = vmatpush.msra.mxu0 0.0
        %1243 = vmatpush.msra.mxu0 0.0
        %1244 = vmatpush.msra.mxu0 0.0
        %1245 = vmatpush.msra.mxu0 %v1229
        %1246 = vmatpush.msra.mxu0 %v1174
        %1247 = vmatmul.f32.gmra.mxu0 %v1181
        %v1248 = vpop.f32.mrf.mxu0
        %v1249 = vadd.f32 %v1178, %v1248
        %1250 = vmatmul.f32.gmra.mxu0 %v1184
        %v1251 = vpop.f32.mrf.mxu0
        %v1252 = vadd.f32 %v1178, %v1251
        %1253 = vmatmul.f32.gmra.mxu0 %v1187
        %v1254 = vpop.f32.mrf.mxu0
        %v1255 = vadd.f32 %v1178, %v1254
        %1256 = vmatmul.f32.gmra.mxu0 %v1190
        %v1257 = vpop.f32.mrf.mxu0
        %v1258 = vadd.f32 %v1178, %v1257
        %1259 = vmatmul.f32.gmra.mxu0 %v1193
        %v1260 = vpop.f32.mrf.mxu0
        %v1261 = vadd.f32 %v1178, %v1260
        %1262 = vmatmul.f32.gmra.mxu0 %v1196
        %v1263 = vpop.f32.mrf.mxu0
        %v1264 = vadd.f32 %v1178, %v1263
        %1265 = vmatmul.f32.gmra.mxu0 %v1199
        %v1266 = vpop.f32.mrf.mxu0
        %v1267 = vadd.f32 %v1178, %v1266
        %1268 = vmatmul.f32.gmra.mxu0 %v1202
        %v1269 = vpop.f32.mrf.mxu0
        %v1270 = vadd.f32 %v1178, %v1269
        %1271 = vmatmul.f32.gmra.mxu0 %v1205
        %v1272 = vpop.f32.mrf.mxu0
        %v1273 = vadd.f32 %v1178, %v1272
        %1274 = vmatmul.f32.gmra.mxu0 %v1208
        %v1275 = vpop.f32.mrf.mxu0
        %v1276 = vadd.f32 %v1178, %v1275
        %1277 = vmatmul.f32.gmra.mxu0 %v1211
        %v1278 = vpop.f32.mrf.mxu0
        %v1279 = vadd.f32 %v1178, %v1278
        %1280 = vmatmul.f32.gmra.mxu0 %v1214
        %v1281 = vpop.f32.mrf.mxu0
        %v1282 = vadd.f32 %v1178, %v1281
        %1283 = vmatmul.f32.gmra.mxu0 %v1217
        %v1284 = vpop.f32.mrf.mxu0
        %v1285 = vadd.f32 %v1178, %v1284
        %1286 = vmatmul.f32.gmra.mxu0 %v1220
        %v1287 = vpop.f32.mrf.mxu0
        %v1288 = vadd.f32 %v1178, %v1287
        %1289 = vmatmul.f32.gmra.mxu0 %v1223
        %v1290 = vpop.f32.mrf.mxu0
        %v1291 = vadd.f32 %v1178, %v1290
        %1292 = vmatmul.f32.gmra.mxu0 %v1226
        %v1293 = vpop.f32.mrf.mxu0
        %v1294 = vadd.f32 %v1178, %v1293
        %1295 = vdwg.mxu0
        %v1296 = vmul.f32 %v1249, 0.5
        %v1297 = vmul.f32 %v1252, 0.5
        %v1298 = vmul.f32 %v1255, 0.5
        %v1299 = vmul.f32 %v1258, 0.5
        %v1300 = vmul.f32 %v1261, 0.5
        %v1301 = vmul.f32 %v1264, 0.5
        %v1302 = vmul.f32 %v1267, 0.5
        %v1303 = vmul.f32 %v1270, 0.5
        %v1304 = vmul.f32 %v1273, 0.5
        %v1305 = vmul.f32 %v1276, 0.5
        %v1306 = vmul.f32 %v1279, 0.5
        %v1307 = vmul.f32 %v1282, 0.5
        %v1308 = vmul.f32 %v1285, 0.5
        %v1309 = vmul.f32 %v1288, 0.5
        %v1310 = vmul.f32 %v1291, 0.5
        %v1311 = vmul.f32 %v1294, 0.5
        %v1312 = vtanh.pop %v1296
        %v1313 = vtanh.pop %v1297
        %v1314 = vtanh.pop %v1298
        %v1315 = vtanh.pop %v1299
        %v1316 = vtanh.pop %v1300
        %v1317 = vtanh.pop %v1301
        %v1318 = vtanh.pop %v1302
        %v1319 = vtanh.pop %v1303
        %v1320 = vtanh.pop %v1304
        %v1321 = vtanh.pop %v1305
        %v1322 = vtanh.pop %v1306
        %v1323 = vtanh.pop %v1307
        %v1324 = vtanh.pop %v1308
        %v1325 = vtanh.pop %v1309
        %v1326 = vtanh.pop %v1310
        %v1327 = vtanh.pop %v1311
        %v1328 = vmul.f32 %v1312, 0.5
        %v1329 = vmul.f32 %v1313, 0.5
        %v1330 = vmul.f32 %v1314, 0.5
        %v1331 = vmul.f32 %v1315, 0.5
        %v1332 = vmul.f32 %v1316, 0.5
        %v1333 = vmul.f32 %v1317, 0.5
        %v1334 = vmul.f32 %v1318, 0.5
        %v1335 = vmul.f32 %v1319, 0.5
        %v1336 = vmul.f32 %v1320, 0.5
        %v1337 = vmul.f32 %v1321, 0.5
        %v1338 = vmul.f32 %v1322, 0.5
        %v1339 = vmul.f32 %v1323, 0.5
        %v1340 = vmul.f32 %v1324, 0.5
        %v1341 = vmul.f32 %v1325, 0.5
        %v1342 = vmul.f32 %v1326, 0.5
        %v1343 = vmul.f32 %v1327, 0.5
        %v1344 = vadd.f32 %v1328, 0.5
        %v1345 = vadd.f32 %v1329, 0.5
        %v1346 = vadd.f32 %v1330, 0.5
        %v1347 = vadd.f32 %v1331, 0.5
        %v1348 = vadd.f32 %v1332, 0.5
        %v1349 = vadd.f32 %v1333, 0.5
        %v1350 = vadd.f32 %v1334, 0.5
        %v1351 = vadd.f32 %v1335, 0.5
        %v1352 = vadd.f32 %v1336, 0.5
        %v1353 = vadd.f32 %v1337, 0.5
        %v1354 = vadd.f32 %v1338, 0.5
        %v1355 = vadd.f32 %v1339, 0.5
        %v1356 = vadd.f32 %v1340, 0.5
        %v1357 = vadd.f32 %v1341, 0.5
        %v1358 = vadd.f32 %v1342, 0.5
        %v1359 = vadd.f32 %v1343, 0.5
        %v1360 = vld [vmem:[%s11] sm:$0xff]
        %v1361 = vld [vmem:[%s11 + $0x8] sm:$0x3]
        %v1362 = vld [vmem:[%s12] sm:$0x1]
        %v1364 = vperm.slane %v1362, 0
        %v1367 = vsel %vm992, %v1344, 0
        %v1370 = vsel %vm992, %v1345, 0
        %v1373 = vsel %vm992, %v1346, 0
        %v1376 = vsel %vm992, %v1347, 0
        %v1379 = vsel %vm992, %v1348, 0
        %v1382 = vsel %vm992, %v1349, 0
        %v1385 = vsel %vm992, %v1350, 0
        %v1388 = vsel %vm992, %v1351, 0
        %v1391 = vsel %vm992, %v1352, 0
        %v1394 = vsel %vm992, %v1353, 0
        %v1397 = vsel %vm992, %v1354, 0
        %v1400 = vsel %vm992, %v1355, 0
        %v1403 = vsel %vm992, %v1356, 0
        %v1406 = vsel %vm992, %v1357, 0
        %v1409 = vsel %vm992, %v1358, 0
        %v1412 = vsel %vm992, %v1359, 0
        %v1415 = vsel %vm1041, %v1361, 0
        %1417 = vmatpush.msra.mxu0 0.0
        %1418 = vmatpush.msra.mxu0 0.0
        %1419 = vmatpush.msra.mxu0 0.0
        %1420 = vmatpush.msra.mxu0 0.0
        %1421 = vmatpush.msra.mxu0 0.0
        %1422 = vmatpush.msra.mxu0 0.0
        %1423 = vmatpush.msra.mxu0 0.0
        %1424 = vmatpush.msra.mxu0 0.0
        %1425 = vmatpush.msra.mxu0 0.0
        %1426 = vmatpush.msra.mxu0 0.0
        %1427 = vmatpush.msra.mxu0 0.0
        %1428 = vmatpush.msra.mxu0 0.0
        %1429 = vmatpush.msra.mxu0 0.0
        %1430 = vmatpush.msra.mxu0 0.0
        %1431 = vmatpush.msra.mxu0 %v1415
        %1432 = vmatpush.msra.mxu0 %v1360
        %1433 = vmatmul.f32.gmra.mxu0 %v1367
        %v1434 = vpop.f32.mrf.mxu0
        %v1435 = vadd.f32 %v1364, %v1434
        %1436 = vmatmul.f32.gmra.mxu0 %v1370
        %v1437 = vpop.f32.mrf.mxu0
        %v1438 = vadd.f32 %v1364, %v1437
        %1439 = vmatmul.f32.gmra.mxu0 %v1373
        %v1440 = vpop.f32.mrf.mxu0
        %v1441 = vadd.f32 %v1364, %v1440
        %1442 = vmatmul.f32.gmra.mxu0 %v1376
        %v1443 = vpop.f32.mrf.mxu0
        %v1444 = vadd.f32 %v1364, %v1443
        %1445 = vmatmul.f32.gmra.mxu0 %v1379
        %v1446 = vpop.f32.mrf.mxu0
        %v1447 = vadd.f32 %v1364, %v1446
        %1448 = vmatmul.f32.gmra.mxu0 %v1382
        %v1449 = vpop.f32.mrf.mxu0
        %v1450 = vadd.f32 %v1364, %v1449
        %1451 = vmatmul.f32.gmra.mxu0 %v1385
        %v1452 = vpop.f32.mrf.mxu0
        %v1453 = vadd.f32 %v1364, %v1452
        %1454 = vmatmul.f32.gmra.mxu0 %v1388
        %v1455 = vpop.f32.mrf.mxu0
        %v1456 = vadd.f32 %v1364, %v1455
        %1457 = vmatmul.f32.gmra.mxu0 %v1391
        %v1458 = vpop.f32.mrf.mxu0
        %v1459 = vadd.f32 %v1364, %v1458
        %1460 = vmatmul.f32.gmra.mxu0 %v1394
        %v1461 = vpop.f32.mrf.mxu0
        %v1462 = vadd.f32 %v1364, %v1461
        %1463 = vmatmul.f32.gmra.mxu0 %v1397
        %v1464 = vpop.f32.mrf.mxu0
        %v1465 = vadd.f32 %v1364, %v1464
        %1466 = vmatmul.f32.gmra.mxu0 %v1400
        %v1467 = vpop.f32.mrf.mxu0
        %v1468 = vadd.f32 %v1364, %v1467
        %1469 = vmatmul.f32.gmra.mxu0 %v1403
        %v1470 = vpop.f32.mrf.mxu0
        %v1471 = vadd.f32 %v1364, %v1470
        %1472 = vmatmul.f32.gmra.mxu0 %v1406
        %v1473 = vpop.f32.mrf.mxu0
        %v1474 = vadd.f32 %v1364, %v1473
        %1475 = vmatmul.f32.gmra.mxu0 %v1409
        %v1476 = vpop.f32.mrf.mxu0
        %v1477 = vadd.f32 %v1364, %v1476
        %1478 = vmatmul.f32.gmra.mxu0 %v1412
        %v1479 = vpop.f32.mrf.mxu0
        %v1480 = vadd.f32 %v1364, %v1479
        %1481 = vdwg.mxu0
        %v1482 = vlaneseq
        %v1483 = vand.u32 %v1482, 127
        %vm1484 = vcmp.lt.s32.totalorder %v1483, 10
        %v1485 = vsel %vm1484, %v1435, -1e+30
        %v1486 = vsel %vm1484, %v1438, -1e+30
        %v1487 = vsel %vm1484, %v1441, -1e+30
        %v1488 = vsel %vm1484, %v1444, -1e+30
        %v1489 = vsel %vm1484, %v1447, -1e+30
        %v1490 = vsel %vm1484, %v1450, -1e+30
        %v1491 = vsel %vm1484, %v1453, -1e+30
        %v1492 = vsel %vm1484, %v1456, -1e+30
        %v1493 = vsel %vm1484, %v1459, -1e+30
        %v1494 = vsel %vm1484, %v1462, -1e+30
        %v1495 = vsel %vm1484, %v1465, -1e+30
        %v1496 = vsel %vm1484, %v1468, -1e+30
        %v1497 = vsel %vm1484, %v1471, -1e+30
        %v1498 = vsel %vm1484, %v1474, -1e+30
        %v1499 = vsel %vm1484, %v1477, -1e+30
        %v1500 = vsel %vm1484, %v1480, -1e+30
        %1501 = vmax.xlane.f32.xlu0 %v1485
        %v1502 = vpop.xlane.xlu0 %1501
        %1503 = vmax.xlane.f32.xlu0 %v1486
        %v1504 = vpop.xlane.xlu0 %1503
        %1505 = vmax.xlane.f32.xlu0 %v1487
        %v1506 = vpop.xlane.xlu0 %1505
        %1507 = vmax.xlane.f32.xlu0 %v1488
        %v1508 = vpop.xlane.xlu0 %1507
        %1509 = vmax.xlane.f32.xlu0 %v1489
        %v1510 = vpop.xlane.xlu0 %1509
        %1511 = vmax.xlane.f32.xlu0 %v1490
        %v1512 = vpop.xlane.xlu0 %1511
        %1513 = vmax.xlane.f32.xlu0 %v1491
        %v1514 = vpop.xlane.xlu0 %1513
        %1515 = vmax.xlane.f32.xlu0 %v1492
        %v1516 = vpop.xlane.xlu0 %1515
        %1517 = vmax.xlane.f32.xlu0 %v1493
        %v1518 = vpop.xlane.xlu0 %1517
        %1519 = vmax.xlane.f32.xlu0 %v1494
        %v1520 = vpop.xlane.xlu0 %1519
        %1521 = vmax.xlane.f32.xlu0 %v1495
        %v1522 = vpop.xlane.xlu0 %1521
        %1523 = vmax.xlane.f32.xlu0 %v1496
        %v1524 = vpop.xlane.xlu0 %1523
        %1525 = vmax.xlane.f32.xlu0 %v1497
        %v1526 = vpop.xlane.xlu0 %1525
        %1527 = vmax.xlane.f32.xlu0 %v1498
        %v1528 = vpop.xlane.xlu0 %1527
        %1529 = vmax.xlane.f32.xlu0 %v1499
        %v1530 = vpop.xlane.xlu0 %1529
        %1531 = vmax.xlane.f32.xlu0 %v1500
        %v1532 = vpop.xlane.xlu0 %1531
        %v1533 = vsub.f32 %v1485, %v1502
        %v1534 = vsub.f32 %v1486, %v1504
        %v1535 = vsub.f32 %v1487, %v1506
        %v1536 = vsub.f32 %v1488, %v1508
        %v1537 = vsub.f32 %v1489, %v1510
        %v1538 = vsub.f32 %v1490, %v1512
        %v1539 = vsub.f32 %v1491, %v1514
        %v1540 = vsub.f32 %v1492, %v1516
        %v1541 = vsub.f32 %v1493, %v1518
        %v1542 = vsub.f32 %v1494, %v1520
        %v1543 = vsub.f32 %v1495, %v1522
        %v1544 = vsub.f32 %v1496, %v1524
        %v1545 = vsub.f32 %v1497, %v1526
        %v1546 = vsub.f32 %v1498, %v1528
        %v1547 = vsub.f32 %v1499, %v1530
        %v1548 = vsub.f32 %v1500, %v1532
        %v1549 = vmul.f32 %v1533, 1.442695
        %v1550 = vpow.pop %v1549
        %v1551 = vmul.f32 %v1534, 1.442695
        %v1552 = vpow.pop %v1551
        %v1553 = vmul.f32 %v1535, 1.442695
        %v1554 = vpow.pop %v1553
        %v1555 = vmul.f32 %v1536, 1.442695
        %v1556 = vpow.pop %v1555
        %v1557 = vmul.f32 %v1537, 1.442695
        %v1558 = vpow.pop %v1557
        %v1559 = vmul.f32 %v1538, 1.442695
        %v1560 = vpow.pop %v1559
        %v1561 = vmul.f32 %v1539, 1.442695
        %v1562 = vpow.pop %v1561
        %v1563 = vmul.f32 %v1540, 1.442695
        %v1564 = vpow.pop %v1563
        %v1565 = vmul.f32 %v1541, 1.442695
        %v1566 = vpow.pop %v1565
        %v1567 = vmul.f32 %v1542, 1.442695
        %v1568 = vpow.pop %v1567
        %v1569 = vmul.f32 %v1543, 1.442695
        %v1570 = vpow.pop %v1569
        %v1571 = vmul.f32 %v1544, 1.442695
        %v1572 = vpow.pop %v1571
        %v1573 = vmul.f32 %v1545, 1.442695
        %v1574 = vpow.pop %v1573
        %v1575 = vmul.f32 %v1546, 1.442695
        %v1576 = vpow.pop %v1575
        %v1577 = vmul.f32 %v1547, 1.442695
        %v1578 = vpow.pop %v1577
        %v1579 = vmul.f32 %v1548, 1.442695
        %v1580 = vpow.pop %v1579
        %v1581 = vsel %vm1484, %v1550, 0.0
        %v1582 = vsel %vm1484, %v1552, 0.0
        %v1583 = vsel %vm1484, %v1554, 0.0
        %v1584 = vsel %vm1484, %v1556, 0.0
        %v1585 = vsel %vm1484, %v1558, 0.0
        %v1586 = vsel %vm1484, %v1560, 0.0
        %v1587 = vsel %vm1484, %v1562, 0.0
        %v1588 = vsel %vm1484, %v1564, 0.0
        %v1589 = vsel %vm1484, %v1566, 0.0
        %v1590 = vsel %vm1484, %v1568, 0.0
        %v1591 = vsel %vm1484, %v1570, 0.0
        %v1592 = vsel %vm1484, %v1572, 0.0
        %v1593 = vsel %vm1484, %v1574, 0.0
        %v1594 = vsel %vm1484, %v1576, 0.0
        %v1595 = vsel %vm1484, %v1578, 0.0
        %v1596 = vsel %vm1484, %v1580, 0.0
        %1597 = vadd.xlane.f32.xlu0 %v1581
        %v1598 = vpop.xlane.xlu0 %1597
        %1599 = vadd.xlane.f32.xlu0 %v1582
        %v1600 = vpop.xlane.xlu0 %1599
        %1601 = vadd.xlane.f32.xlu0 %v1583
        %v1602 = vpop.xlane.xlu0 %1601
        %1603 = vadd.xlane.f32.xlu0 %v1584
        %v1604 = vpop.xlane.xlu0 %1603
        %1605 = vadd.xlane.f32.xlu0 %v1585
        %v1606 = vpop.xlane.xlu0 %1605
        %1607 = vadd.xlane.f32.xlu0 %v1586
        %v1608 = vpop.xlane.xlu0 %1607
        %1609 = vadd.xlane.f32.xlu0 %v1587
        %v1610 = vpop.xlane.xlu0 %1609
        %1611 = vadd.xlane.f32.xlu0 %v1588
        %v1612 = vpop.xlane.xlu0 %1611
        %1613 = vadd.xlane.f32.xlu0 %v1589
        %v1614 = vpop.xlane.xlu0 %1613
        %1615 = vadd.xlane.f32.xlu0 %v1590
        %v1616 = vpop.xlane.xlu0 %1615
        %1617 = vadd.xlane.f32.xlu0 %v1591
        %v1618 = vpop.xlane.xlu0 %1617
        %1619 = vadd.xlane.f32.xlu0 %v1592
        %v1620 = vpop.xlane.xlu0 %1619
        %1621 = vadd.xlane.f32.xlu0 %v1593
        %v1622 = vpop.xlane.xlu0 %1621
        %1623 = vadd.xlane.f32.xlu0 %v1594
        %v1624 = vpop.xlane.xlu0 %1623
        %1625 = vadd.xlane.f32.xlu0 %v1595
        %v1626 = vpop.xlane.xlu0 %1625
        %1627 = vadd.xlane.f32.xlu0 %v1596
        %v1628 = vpop.xlane.xlu0 %1627
        %v1629 = vlog2.pop %v1598
        %v1630 = vmul.f32 %v1629, 0.6931472
        %v1631 = vlog2.pop %v1600
        %v1632 = vmul.f32 %v1631, 0.6931472
        %v1633 = vlog2.pop %v1602
        %v1634 = vmul.f32 %v1633, 0.6931472
        %v1635 = vlog2.pop %v1604
        %v1636 = vmul.f32 %v1635, 0.6931472
        %v1637 = vlog2.pop %v1606
        %v1638 = vmul.f32 %v1637, 0.6931472
        %v1639 = vlog2.pop %v1608
        %v1640 = vmul.f32 %v1639, 0.6931472
        %v1641 = vlog2.pop %v1610
        %v1642 = vmul.f32 %v1641, 0.6931472
        %v1643 = vlog2.pop %v1612
        %v1644 = vmul.f32 %v1643, 0.6931472
        %v1645 = vlog2.pop %v1614
        %v1646 = vmul.f32 %v1645, 0.6931472
        %v1647 = vlog2.pop %v1616
        %v1648 = vmul.f32 %v1647, 0.6931472
        %v1649 = vlog2.pop %v1618
        %v1650 = vmul.f32 %v1649, 0.6931472
        %v1651 = vlog2.pop %v1620
        %v1652 = vmul.f32 %v1651, 0.6931472
        %v1653 = vlog2.pop %v1622
        %v1654 = vmul.f32 %v1653, 0.6931472
        %v1655 = vlog2.pop %v1624
        %v1656 = vmul.f32 %v1655, 0.6931472
        %v1657 = vlog2.pop %v1626
        %v1658 = vmul.f32 %v1657, 0.6931472
        %v1659 = vlog2.pop %v1628
        %v1660 = vmul.f32 %v1659, 0.6931472
        %v1661 = vsub.f32 %v1533, %v1630
        %v1662 = vsub.f32 %v1534, %v1632
        %v1663 = vsub.f32 %v1535, %v1634
        %v1664 = vsub.f32 %v1536, %v1636
        %v1665 = vsub.f32 %v1537, %v1638
        %v1666 = vsub.f32 %v1538, %v1640
        %v1667 = vsub.f32 %v1539, %v1642
        %v1668 = vsub.f32 %v1540, %v1644
        %v1669 = vsub.f32 %v1541, %v1646
        %v1670 = vsub.f32 %v1542, %v1648
        %v1671 = vsub.f32 %v1543, %v1650
        %v1672 = vsub.f32 %v1544, %v1652
        %v1673 = vsub.f32 %v1545, %v1654
        %v1674 = vsub.f32 %v1546, %v1656
        %v1675 = vsub.f32 %v1547, %v1658
        %v1676 = vsub.f32 %v1548, %v1660
        %1677 = vst [vmem:[%s434] sm:$0xff] %v1661
        %1678 = vst [vmem:[%s434 + $0x8] sm:$0xff] %v1662
        %1679 = vst [vmem:[%s434 + $0x10] sm:$0xff] %v1663
        %1680 = vst [vmem:[%s434 + $0x18] sm:$0xff] %v1664
        %1681 = vst [vmem:[%s434 + $0x20] sm:$0xff] %v1665
        %1682 = vst [vmem:[%s434 + $0x28] sm:$0xff] %v1666
        %1683 = vst [vmem:[%s434 + $0x30] sm:$0xff] %v1667
        %1684 = vst [vmem:[%s434 + $0x38] sm:$0xff] %v1668
        %1685 = vst [vmem:[%s434 + $0x40] sm:$0xff] %v1669
        %1686 = vst [vmem:[%s434 + $0x48] sm:$0xff] %v1670
        %1687 = vst [vmem:[%s434 + $0x50] sm:$0xff] %v1671
        %1688 = vst [vmem:[%s434 + $0x58] sm:$0xff] %v1672
        %1689 = vst [vmem:[%s434 + $0x60] sm:$0xff] %v1673
        %1690 = vst [vmem:[%s434 + $0x68] sm:$0xff] %v1674
        %1691 = vst [vmem:[%s434 + $0x70] sm:$0xff] %v1675
        %1692 = vst [vmem:[%s434 + $0x78] sm:$0xff] %v1676
        %s1693 = sand.u32 %s313, 1
        %s1694 = scalar_lea.sflag [#allocation3], %s1693
        %s1695 = sand.u32 %s313, 1
        %s1696 = smul.addr %s1695, 128
        %s1697 = scalar_lea.vmem [#allocation2], %s1696
        // Predicated region
        $region73: #{tpu_custom_call.1} parent=71 // pred_check
          %p1698 = pneg %p323
        $region74: #{tpu_custom_call.1} parent=71 // pred_check_branch
          %1700 = sbr.rel (%p1698) target = $region76
        $region75: #{tpu_custom_call.1} parent=71 // pred_region
          %s1701 = smul.u32 16, %s27
          %1703 = vsyncadd %s1694, 0
          %s1704 = smul.addr %s1701, 8
          %s1705 = scalar_lea.hbm %s13, %s1704
          %s1706 = sshll.u32 %s1697, 4
          %s1707 = int_to_ptr.vmem [resolvable:$true] %s1706
          %s1708 = sshll.u32 %s1705, 4
          %s1709 = int_to_ptr.hbm [resolvable:$true] %s1708
          %1714 = dma.vmem_to_hbm [thread:$0]  %s1707, 2048, %s1709, %s1694, 128, 128, 8
        $region76: #{tpu_custom_call.1} parent=71 // pred_fallthru
          _
      $region72: #{tpu_custom_call.1} parent=5 // pred_fallthru
        _
      %p1715 = scmp.le.s32.totalorder 2, %s22
      // Predicated region
      $region77: #{tpu_custom_call.1} parent=5 // pred_check
        %p1716 = pneg %p1715
      $region78: #{tpu_custom_call.1} parent=5 // pred_check_branch
        %1718 = sbr.rel (%p1716) target = $region80
      $region79: #{tpu_custom_call.1} parent=5 // pred_region
        %s1719 = ssub.s32 %s22, 2
        // Predicated region
        $region81: #{tpu_custom_call.1} parent=79 // pred_check
          %p1720 = pneg %p329
        $region82: #{tpu_custom_call.1} parent=79 // pred_check_branch
          %1722 = sbr.rel (%p1720) target = $region84
        $region83: #{tpu_custom_call.1} parent=79 // pred_region
          %s1723 = sand.u32 %s314, 1
          %s1724 = scalar_lea.sflag [#allocation3], %s1723
          %s1725 = sand.u32 %s314, 1
          %s1726 = smul.addr %s1725, 128
          %s1727 = scalar_lea.vmem [#allocation2], %s1726
          %1729 = dma.done %s1724, 2048
        $region84: #{tpu_custom_call.1} parent=79 // pred_fallthru
          _
      $region80: #{tpu_custom_call.1} parent=5 // pred_fallthru
        _
    $region6: #{tpu_custom_call.1} parent=1 // loop_footer
      %s26 = sadd.s32 1, %s22
    $region7: #{tpu_custom_call.1} parent=1 // loop_footer_branch
      %21 = sbr.rel target = $region3
    $region8: #{tpu_custom_call.1} parent=1 // loop_exit
      _
    %1730 = vsyncpa [#allocation3], 1
    %s1731 = scalar_lea.sflag [#allocation3], 1
    %1732 = vsyncpa %s1731, 1

</llo_original>
